<compile_context>
chip_gen: v7x
topology: tpu7x:2x2x1
jax: 0.10.0
libtpu: 0.0.40
codegen_flags: <defaults>
</compile_context>

<pallas_src>
import functools

import jax
import jax.numpy as jnp
from jax.experimental import pallas as pl
from jax.experimental.pallas import tpu as pltpu

_EPS = 1e-5            # nn.LayerNorm default eps
_BF16 = jnp.bfloat16
_PREC = jax.lax.Precision.HIGHEST   # only used by the pure-JAX reference


def _gelu(x):
    # tanh-form GELU: the transcendental goes to the EUP slot instead of a
    # long VALU polynomial; deviation from exact-erf GELU is far below the
    # test tolerance at these activation magnitudes.
    c = 0.7978845608028654  # sqrt(2/pi)
    return 0.5 * x * (1.0 + jnp.tanh(c * (x + 0.044715 * x * x * x)))


def _layernorm(x, gamma, beta):
    mean = jnp.mean(x, axis=-1, keepdims=True)
    var = jnp.mean(jnp.square(x - mean), axis=-1, keepdims=True)
    return (x - mean) * jax.lax.rsqrt(var + _EPS) * gamma + beta


def _mixer_kernel(depth,
                  x_ref, gam_ref, bet_ref,
                  w1t_ref, b1t_ref, w2t_ref, b2t_ref,
                  w1c_ref, b1c_ref, w2c_ref, b2c_ref,
                  wh_ref, bh_ref, o_ref):
    TB, P, D = x_ref.shape
    Pi = w1t_ref.shape[1]
    N2 = TB * P

    x = x_ref[...].reshape(N2, D)            # residual stream as a 2-D slab
    for l in range(depth):                   # depth is static -> python unroll
        # ---- token mixing: PreNormResidual(FeedForward(P, 4, Conv1d k=1)) ----
        y = _layernorm(x, gam_ref[2 * l], bet_ref[2 * l])                  # [N2, D]
        y3 = y.reshape(TB, P, D).astype(_BF16)
        w1 = jnp.broadcast_to(w1t_ref[l].astype(_BF16)[None], (TB, Pi, P))
        h = jnp.einsum('bqp,bpd->bqd', w1, y3,
                       preferred_element_type=jnp.float32) + b1t_ref[l]    # [TB, Pi, D]
        h = _gelu(h).astype(_BF16)
        w2 = jnp.broadcast_to(w2t_ref[l].astype(_BF16)[None], (TB, P, Pi))
        t = jnp.einsum('bpq,bqd->bpd', w2, h,
                       preferred_element_type=jnp.float32) + b2t_ref[l]    # [TB, P, D]
        x = x + t.reshape(N2, D)
        # ---- channel mixing: PreNormResidual(FeedForward(D, 0.5, Linear)) ----
        y = _layernorm(x, gam_ref[2 * l + 1], bet_ref[2 * l + 1])          # [N2, D]
        h = jnp.dot(y.astype(_BF16), w1c_ref[l].astype(_BF16),
                    preferred_element_type=jnp.float32) + b1c_ref[l]       # [N2, Di]
        h = _gelu(h).astype(_BF16)
        c = jnp.dot(h, w2c_ref[l].astype(_BF16),
                    preferred_element_type=jnp.float32) + b2c_ref[l]       # [N2, D]
        x = x + c

    # final LayerNorm(feature_dimension)
    x = _layernorm(x, gam_ref[2 * depth], bet_ref[2 * depth])
    # AdaptiveAvgPool2d((1, D)) on [P, D] == mean over patches, per sample
    pooled = jnp.mean(x.reshape(TB, P, D), axis=1)                         # [TB, D]
    # head (Linear, padded to a 128-lane class dim) + Softmax(dim=1), eval mode.
    # Padded classes carry bias -1e30 -> exp underflows to 0 -> prob 0.
    logits = jnp.dot(pooled.astype(_BF16), wh_ref[...].astype(_BF16),
                     preferred_element_type=jnp.float32) + bh_ref[...]     # [TB, Cp]
    m = jnp.max(logits, axis=-1, keepdims=True)
    e = jnp.exp(logits - m)
    s = jnp.sum(e, axis=-1, keepdims=True)
    o_ref[...] = e * pl.reciprocal(s, approx=True)


def _pick_tb(B):
    """Batch-tile size: whole batch if small, else tiles of 8 (keeps the output
    block's sublane dim legal and gives >=2 grid steps for v7x megacore)."""
    if B <= 8:
        return B
    if B % 8 == 0:
        return 8
    return B


def mlp_mixer_pallas(x, params, depth):
    B, P, D = x.shape
    gam, bet, w1t, b1t, w2t, b2t, w1c, b1c, w2c, b2c, wh, bh = params
    C = wh.shape[1]
    Cp = ((C + 127) // 128) * 128
    # Pad the head so the kernel writes one lane-dense [TB, Cp] tile per step.
    wh_p = jnp.zeros((D, Cp), jnp.float32).at[:, :C].set(wh)
    bh_p = jnp.full((1, Cp), -1e30, jnp.float32).at[:, :C].set(bh)

    TB = _pick_tb(B)
    grid = (B // TB,)

    def full_spec(arr):
        return pl.BlockSpec(arr.shape, lambda t, n=arr.ndim: (0,) * n)

    grid_spec = pltpu.PrefetchScalarGridSpec(
        num_scalar_prefetch=0,
        grid=grid,
        in_specs=[
            pl.BlockSpec((TB, P, D), lambda t: (t, 0, 0)),
            full_spec(gam), full_spec(bet),
            full_spec(w1t), full_spec(b1t), full_spec(w2t), full_spec(b2t),
            full_spec(w1c), full_spec(b1c), full_spec(w2c), full_spec(b2c),
            full_spec(wh_p), full_spec(bh_p),
        ],
        out_specs=pl.BlockSpec((TB, Cp), lambda t: (t, 0)),
    )
    out = pl.pallas_call(
        functools.partial(_mixer_kernel, depth),
        out_shape=jax.ShapeDtypeStruct((B, Cp), jnp.float32),
        grid_spec=grid_spec,
        compiler_params=pltpu.CompilerParams(dimension_semantics=("parallel",)),
    )(x, gam, bet, w1t, b1t, w2t, b2t, w1c, b1c, w2c, b2c, wh_p, bh_p)
    return out[:, :C]


def init_params(key, P, D, depth, C, expansion=4, expansion_token=0.5):
    Pi = int(P * expansion)
    Di = int(D * expansion_token)
    ks = iter(jax.random.split(key, 64))
    nrm = lambda shape, s=0.05: s * jax.random.normal(next(ks), shape, jnp.float32)
    # LayerNorm params: 2 per mixer block + 1 final, stored [1, D] rows
    gam = 1.0 + 0.1 * jax.random.normal(next(ks), (2 * depth + 1, 1, D), jnp.float32)
    bet = 0.1 * jax.random.normal(next(ks), (2 * depth + 1, 1, D), jnp.float32)
    # token-mixing Conv1d(k=1) weights: [out, in] (kernel dim squeezed)
    w1t = nrm((depth, Pi, P))
    b1t = nrm((depth, Pi, 1))
    w2t = nrm((depth, P, Pi))
    b2t = nrm((depth, P, 1))
    # channel-mixing Linear weights, stored pre-transposed as [in, out]
    w1c = nrm((depth, D, Di))
    b1c = nrm((depth, 1, Di))
    w2c = nrm((depth, Di, D))
    b2c = nrm((depth, 1, D))
    # head Linear, stored as [D, C]
    wh = nrm((D, C))
    bh = nrm((1, C))
    return (gam, bet, w1t, b1t, w2t, b2t, w1c, b1c, w2c, b2c, wh, bh)


def mlp_mixer_ref(x, params, depth):
    # pure-JAX f32 reference (exact erf GELU) for correctness checking
    gam, bet, w1t, b1t, w2t, b2t, w1c, b1c, w2c, b2c, wh, bh = params

    def ln(v, g, b):
        mean = jnp.mean(v, -1, keepdims=True)
        var = jnp.mean(jnp.square(v - mean), -1, keepdims=True)
        return (v - mean) / jnp.sqrt(var + _EPS) * g + b

    def gelu(v):
        return 0.5 * v * (1.0 + jax.scipy.special.erf(v / jnp.sqrt(2.0)))

    for l in range(depth):
        y = ln(x, gam[2 * l], bet[2 * l])
        h = gelu(jnp.einsum('qp,bpd->bqd', w1t[l], y, precision=_PREC) + b1t[l])
        x = x + jnp.einsum('pq,bqd->bpd', w2t[l], h, precision=_PREC) + b2t[l]
        y = ln(x, gam[2 * l + 1], bet[2 * l + 1])
        h = gelu(jnp.einsum('bpd,de->bpe', y, w1c[l], precision=_PREC) + b1c[l])
        x = x + jnp.einsum('bpe,ed->bpd', h, w2c[l], precision=_PREC) + b2c[l]
    x = ln(x, gam[2 * depth], bet[2 * depth])
    pooled = jnp.mean(x, axis=1)                                   # [B, D]
    logits = jnp.dot(pooled, wh, precision=_PREC) + bh[0]
    return jax.nn.softmax(logits, axis=1)


if __name__ == "__main__":
    # small shapes consistent with the module:
    # num_features (patches) = 8, feature_dimension = 32, depth = 2, classes = 10
    B, P, D, depth, C = 2, 8, 32, 2, 10
    key = jax.random.PRNGKey(0)
    kx, kp = jax.random.split(key)
    x = jax.random.normal(kx, (B, P, D), jnp.float32)
    params = init_params(kp, P, D, depth, C)

    out = mlp_mixer_pallas(x, params, depth)
    jax.block_until_ready(out)

    ref = mlp_mixer_ref(x, params, depth)
    assert out.shape == (B, C), out.shape
    assert jnp.allclose(out, ref, rtol=5e-2, atol=2e-3), (out, ref)
    print("KERNEL_OK")
</pallas_src>

<mosaic_0001>
module attributes {stable_mosaic.version = 11 : i64} {
  func.func @_mixer_kernel(%arg0: i32, %arg1: memref<2x8x32xf32, #tpu.memory_space<vmem>>, %arg2: memref<5x1x32xf32, #tpu.memory_space<vmem>>, %arg3: memref<5x1x32xf32, #tpu.memory_space<vmem>>, %arg4: memref<2x32x8xf32, #tpu.memory_space<vmem>>, %arg5: memref<2x32x1xf32, #tpu.memory_space<vmem>>, %arg6: memref<2x8x32xf32, #tpu.memory_space<vmem>>, %arg7: memref<2x8x1xf32, #tpu.memory_space<vmem>>, %arg8: memref<2x32x16xf32, #tpu.memory_space<vmem>>, %arg9: memref<2x1x16xf32, #tpu.memory_space<vmem>>, %arg10: memref<2x16x32xf32, #tpu.memory_space<vmem>>, %arg11: memref<2x1x32xf32, #tpu.memory_space<vmem>>, %arg12: memref<32x128xf32, #tpu.memory_space<vmem>>, %arg13: memref<1x128xf32, #tpu.memory_space<vmem>>, %arg14: memref<2x128xf32, #tpu.memory_space<vmem>>) attributes {dimension_semantics = [#tpu.dimension_semantics<parallel>], iteration_bounds = array<i64: 1>, scalar_prefetch = 0 : i64, scratch_operands = 0 : i64, tpu.core_type = #tpu.core_type<tc>, window_params = [{transform_indices = @transform_0, window_bounds = array<i64: 2, 8, 32>}, {pipeline_mode = #tpu.pipeline_mode<synchronous>, transform_indices = @transform_1, window_bounds = array<i64: 5, 1, 32>}, {pipeline_mode = #tpu.pipeline_mode<synchronous>, transform_indices = @transform_2, window_bounds = array<i64: 5, 1, 32>}, {pipeline_mode = #tpu.pipeline_mode<synchronous>, transform_indices = @transform_3, window_bounds = array<i64: 2, 32, 8>}, {pipeline_mode = #tpu.pipeline_mode<synchronous>, transform_indices = @transform_4, window_bounds = array<i64: 2, 32, 1>}, {pipeline_mode = #tpu.pipeline_mode<synchronous>, transform_indices = @transform_5, window_bounds = array<i64: 2, 8, 32>}, {pipeline_mode = #tpu.pipeline_mode<synchronous>, transform_indices = @transform_6, window_bounds = array<i64: 2, 8, 1>}, {pipeline_mode = #tpu.pipeline_mode<synchronous>, transform_indices = @transform_7, window_bounds = array<i64: 2, 32, 16>}, {pipeline_mode = #tpu.pipeline_mode<synchronous>, transform_indices = @transform_8, window_bounds = array<i64: 2, 1, 16>}, {pipeline_mode = #tpu.pipeline_mode<synchronous>, transform_indices = @transform_9, window_bounds = array<i64: 2, 16, 32>}, {pipeline_mode = #tpu.pipeline_mode<synchronous>, transform_indices = @transform_10, window_bounds = array<i64: 2, 1, 32>}, {pipeline_mode = #tpu.pipeline_mode<synchronous>, transform_indices = @transform_11, window_bounds = array<i64: 32, 128>}, {pipeline_mode = #tpu.pipeline_mode<synchronous>, transform_indices = @transform_12, window_bounds = array<i64: 1, 128>}, {transform_indices = @transform_13, window_bounds = array<i64: 2, 128>}]} {
    %c0 = arith.constant 0 : index
    %c0_0 = arith.constant 0 : index
    %c0_1 = arith.constant 0 : index
    %0 = vector.load %arg1[%c0, %c0_0, %c0_1] : memref<2x8x32xf32, #tpu.memory_space<vmem>>, vector<2x8x32xf32>
    %1 = vector.shape_cast %0 : vector<2x8x32xf32> to vector<16x32xf32>
    %c0_2 = arith.constant 0 : index
    %c0_3 = arith.constant 0 : index
    %c0_4 = arith.constant 0 : index
    %2 = vector.load %arg2[%c0_2, %c0_3, %c0_4] : memref<5x1x32xf32, #tpu.memory_space<vmem>>, vector<1x1x32xf32>
    %3 = vector.shape_cast %2 : vector<1x1x32xf32> to vector<1x32xf32>
    %c0_5 = arith.constant 0 : index
    %c0_6 = arith.constant 0 : index
    %c0_7 = arith.constant 0 : index
    %4 = vector.load %arg3[%c0_5, %c0_6, %c0_7] : memref<5x1x32xf32, #tpu.memory_space<vmem>>, vector<1x1x32xf32>
    %5 = vector.shape_cast %4 : vector<1x1x32xf32> to vector<1x32xf32>
    %cst = arith.constant dense<0.000000e+00> : vector<16xf32>
    %6 = vector.multi_reduction <add>, %1, %cst [1] : vector<16x32xf32> to vector<16xf32>
    %7 = vector.shape_cast %6 : vector<16xf32> to vector<16x1xf32>
    %cst_8 = arith.constant 3.200000e+01 : f32
    %8 = vector.broadcast %cst_8 : f32 to vector<16x1xf32>
    %9 = arith.divf %7, %8 : vector<16x1xf32>
    %10 = vector.broadcast %9 : vector<16x1xf32> to vector<16x32xf32>
    %11 = arith.subf %1, %10 : vector<16x32xf32>
    %12 = arith.mulf %11, %11 : vector<16x32xf32>
    %cst_9 = arith.constant dense<0.000000e+00> : vector<16xf32>
    %13 = vector.multi_reduction <add>, %12, %cst_9 [1] : vector<16x32xf32> to vector<16xf32>
    %14 = vector.shape_cast %13 : vector<16xf32> to vector<16x1xf32>
    %cst_10 = arith.constant 3.200000e+01 : f32
    %15 = vector.broadcast %cst_10 : f32 to vector<16x1xf32>
    %16 = arith.divf %14, %15 : vector<16x1xf32>
    %17 = vector.broadcast %9 : vector<16x1xf32> to vector<16x32xf32>
    %18 = arith.subf %1, %17 : vector<16x32xf32>
    %cst_11 = arith.constant 9.99999974E-6 : f32
    %19 = vector.broadcast %cst_11 : f32 to vector<16x1xf32>
    %20 = arith.addf %16, %19 : vector<16x1xf32>
    %21 = math.rsqrt %20 : vector<16x1xf32>
    %22 = vector.broadcast %21 : vector<16x1xf32> to vector<16x32xf32>
    %23 = arith.mulf %18, %22 : vector<16x32xf32>
    %24 = vector.broadcast %3 : vector<1x32xf32> to vector<16x32xf32>
    %25 = arith.mulf %23, %24 : vector<16x32xf32>
    %26 = vector.broadcast %5 : vector<1x32xf32> to vector<16x32xf32>
    %27 = arith.addf %25, %26 : vector<16x32xf32>
    %28 = vector.shape_cast %27 : vector<16x32xf32> to vector<2x8x32xf32>
    %29 = arith.truncf %28 : vector<2x8x32xf32> to vector<2x8x32xbf16>
    %c0_12 = arith.constant 0 : index
    %c0_13 = arith.constant 0 : index
    %c0_14 = arith.constant 0 : index
    %30 = vector.load %arg4[%c0_12, %c0_13, %c0_14] : memref<2x32x8xf32, #tpu.memory_space<vmem>>, vector<1x32x8xf32>
    %31 = vector.shape_cast %30 : vector<1x32x8xf32> to vector<32x8xf32>
    %32 = arith.truncf %31 : vector<32x8xf32> to vector<32x8xbf16>
    %33 = vector.shape_cast %32 : vector<32x8xbf16> to vector<1x32x8xbf16>
    %34 = vector.shape_cast %33 : vector<1x32x8xbf16> to vector<1x32x8xbf16>
    %35 = vector.broadcast %34 : vector<1x32x8xbf16> to vector<2x32x8xbf16>
    "tpu.trace_start"() <{level = 10 : i32, message = "bqp,bpd->bqd"}> : () -> ()
    %cst_15 = arith.constant dense<0.000000e+00> : vector<2x32x32xf32>
    %36 = tpu.matmul %35, %29, %cst_15 {dimension_numbers = #tpu.dot_dimension_numbers<[2], [1], [1], [2], [0, 0, 0, 1, 1, 2], [0], [0]>} : vector<2x32x8xbf16>, vector<2x8x32xbf16>, vector<2x32x32xf32> -> vector<2x32x32xf32>
    "tpu.trace_stop"() : () -> ()
    %c0_16 = arith.constant 0 : index
    %c0_17 = arith.constant 0 : index
    %c0_18 = arith.constant 0 : index
    %37 = vector.load %arg5[%c0_16, %c0_17, %c0_18] : memref<2x32x1xf32, #tpu.memory_space<vmem>>, vector<1x32x1xf32>
    %38 = vector.shape_cast %37 : vector<1x32x1xf32> to vector<32x1xf32>
    %39 = vector.shape_cast %38 : vector<32x1xf32> to vector<1x32x1xf32>
    %40 = vector.broadcast %39 : vector<1x32x1xf32> to vector<2x32x32xf32>
    %41 = arith.addf %36, %40 : vector<2x32x32xf32>
    %cst_19 = arith.constant 5.000000e-01 : f32
    %42 = vector.broadcast %cst_19 : f32 to vector<2x32x32xf32>
    %43 = arith.mulf %42, %41 : vector<2x32x32xf32>
    %cst_20 = arith.constant 4.471500e-02 : f32
    %44 = vector.broadcast %cst_20 : f32 to vector<2x32x32xf32>
    %45 = arith.mulf %44, %41 : vector<2x32x32xf32>
    %46 = arith.mulf %45, %41 : vector<2x32x32xf32>
    %47 = arith.mulf %46, %41 : vector<2x32x32xf32>
    %48 = arith.addf %41, %47 : vector<2x32x32xf32>
    %cst_21 = arith.constant 0.797884583 : f32
    %49 = vector.broadcast %cst_21 : f32 to vector<2x32x32xf32>
    %50 = arith.mulf %49, %48 : vector<2x32x32xf32>
    %51 = math.tanh %50 : vector<2x32x32xf32>
    %cst_22 = arith.constant 1.000000e+00 : f32
    %52 = vector.broadcast %cst_22 : f32 to vector<2x32x32xf32>
    %53 = arith.addf %52, %51 : vector<2x32x32xf32>
    %54 = arith.mulf %43, %53 : vector<2x32x32xf32>
    %55 = arith.truncf %54 : vector<2x32x32xf32> to vector<2x32x32xbf16>
    %c0_23 = arith.constant 0 : index
    %c0_24 = arith.constant 0 : index
    %c0_25 = arith.constant 0 : index
    %56 = vector.load %arg6[%c0_23, %c0_24, %c0_25] : memref<2x8x32xf32, #tpu.memory_space<vmem>>, vector<1x8x32xf32>
    %57 = vector.shape_cast %56 : vector<1x8x32xf32> to vector<8x32xf32>
    %58 = arith.truncf %57 : vector<8x32xf32> to vector<8x32xbf16>
    %59 = vector.shape_cast %58 : vector<8x32xbf16> to vector<1x8x32xbf16>
    %60 = vector.shape_cast %59 : vector<1x8x32xbf16> to vector<1x8x32xbf16>
    %61 = vector.broadcast %60 : vector<1x8x32xbf16> to vector<2x8x32xbf16>
    "tpu.trace_start"() <{level = 10 : i32, message = "bpq,bqd->bpd"}> : () -> ()
    %cst_26 = arith.constant dense<0.000000e+00> : vector<2x8x32xf32>
    %62 = tpu.matmul %61, %55, %cst_26 {dimension_numbers = #tpu.dot_dimension_numbers<[2], [1], [1], [2], [0, 0, 0, 1, 1, 2], [0], [0]>} : vector<2x8x32xbf16>, vector<2x32x32xbf16>, vector<2x8x32xf32> -> vector<2x8x32xf32>
    "tpu.trace_stop"() : () -> ()
    %c0_27 = arith.constant 0 : index
    %c0_28 = arith.constant 0 : index
    %c0_29 = arith.constant 0 : index
    %63 = vector.load %arg7[%c0_27, %c0_28, %c0_29] : memref<2x8x1xf32, #tpu.memory_space<vmem>>, vector<1x8x1xf32>
    %64 = vector.shape_cast %63 : vector<1x8x1xf32> to vector<8x1xf32>
    %65 = vector.shape_cast %64 : vector<8x1xf32> to vector<1x8x1xf32>
    %66 = vector.broadcast %65 : vector<1x8x1xf32> to vector<2x8x32xf32>
    %67 = arith.addf %62, %66 : vector<2x8x32xf32>
    %68 = vector.shape_cast %67 : vector<2x8x32xf32> to vector<16x32xf32>
    %69 = arith.addf %1, %68 : vector<16x32xf32>
    %c1 = arith.constant 1 : index
    %c0_30 = arith.constant 0 : index
    %c0_31 = arith.constant 0 : index
    %70 = vector.load %arg2[%c1, %c0_30, %c0_31] : memref<5x1x32xf32, #tpu.memory_space<vmem>>, vector<1x1x32xf32>
    %71 = vector.shape_cast %70 : vector<1x1x32xf32> to vector<1x32xf32>
    %c1_32 = arith.constant 1 : index
    %c0_33 = arith.constant 0 : index
    %c0_34 = arith.constant 0 : index
    %72 = vector.load %arg3[%c1_32, %c0_33, %c0_34] : memref<5x1x32xf32, #tpu.memory_space<vmem>>, vector<1x1x32xf32>
    %73 = vector.shape_cast %72 : vector<1x1x32xf32> to vector<1x32xf32>
    %cst_35 = arith.constant dense<0.000000e+00> : vector<16xf32>
    %74 = vector.multi_reduction <add>, %69, %cst_35 [1] : vector<16x32xf32> to vector<16xf32>
    %75 = vector.shape_cast %74 : vector<16xf32> to vector<16x1xf32>
    %cst_36 = arith.constant 3.200000e+01 : f32
    %76 = vector.broadcast %cst_36 : f32 to vector<16x1xf32>
    %77 = arith.divf %75, %76 : vector<16x1xf32>
    %78 = vector.broadcast %77 : vector<16x1xf32> to vector<16x32xf32>
    %79 = arith.subf %69, %78 : vector<16x32xf32>
    %80 = arith.mulf %79, %79 : vector<16x32xf32>
    %cst_37 = arith.constant dense<0.000000e+00> : vector<16xf32>
    %81 = vector.multi_reduction <add>, %80, %cst_37 [1] : vector<16x32xf32> to vector<16xf32>
    %82 = vector.shape_cast %81 : vector<16xf32> to vector<16x1xf32>
    %cst_38 = arith.constant 3.200000e+01 : f32
    %83 = vector.broadcast %cst_38 : f32 to vector<16x1xf32>
    %84 = arith.divf %82, %83 : vector<16x1xf32>
    %85 = vector.broadcast %77 : vector<16x1xf32> to vector<16x32xf32>
    %86 = arith.subf %69, %85 : vector<16x32xf32>
    %cst_39 = arith.constant 9.99999974E-6 : f32
    %87 = vector.broadcast %cst_39 : f32 to vector<16x1xf32>
    %88 = arith.addf %84, %87 : vector<16x1xf32>
    %89 = math.rsqrt %88 : vector<16x1xf32>
    %90 = vector.broadcast %89 : vector<16x1xf32> to vector<16x32xf32>
    %91 = arith.mulf %86, %90 : vector<16x32xf32>
    %92 = vector.broadcast %71 : vector<1x32xf32> to vector<16x32xf32>
    %93 = arith.mulf %91, %92 : vector<16x32xf32>
    %94 = vector.broadcast %73 : vector<1x32xf32> to vector<16x32xf32>
    %95 = arith.addf %93, %94 : vector<16x32xf32>
    %96 = arith.truncf %95 : vector<16x32xf32> to vector<16x32xbf16>
    %c0_40 = arith.constant 0 : index
    %c0_41 = arith.constant 0 : index
    %c0_42 = arith.constant 0 : index
    %97 = vector.load %arg8[%c0_40, %c0_41, %c0_42] : memref<2x32x16xf32, #tpu.memory_space<vmem>>, vector<1x32x16xf32>
    %98 = vector.shape_cast %97 : vector<1x32x16xf32> to vector<32x16xf32>
    %99 = arith.truncf %98 : vector<32x16xf32> to vector<32x16xbf16>
    %cst_43 = arith.constant dense<0.000000e+00> : vector<16x16xf32>
    %100 = tpu.matmul %96, %99, %cst_43 {dimension_numbers = #tpu.dot_dimension_numbers<[1], [0], [0], [1], [0, 0, 1, 1], [], []>} : vector<16x32xbf16>, vector<32x16xbf16>, vector<16x16xf32> -> vector<16x16xf32>
    %c0_44 = arith.constant 0 : index
    %c0_45 = arith.constant 0 : index
    %c0_46 = arith.constant 0 : index
    %101 = vector.load %arg9[%c0_44, %c0_45, %c0_46] : memref<2x1x16xf32, #tpu.memory_space<vmem>>, vector<1x1x16xf32>
    %102 = vector.shape_cast %101 : vector<1x1x16xf32> to vector<1x16xf32>
    %103 = vector.broadcast %102 : vector<1x16xf32> to vector<16x16xf32>
    %104 = arith.addf %100, %103 : vector<16x16xf32>
    %cst_47 = arith.constant 5.000000e-01 : f32
    %105 = vector.broadcast %cst_47 : f32 to vector<16x16xf32>
    %106 = arith.mulf %105, %104 : vector<16x16xf32>
    %cst_48 = arith.constant 4.471500e-02 : f32
    %107 = vector.broadcast %cst_48 : f32 to vector<16x16xf32>
    %108 = arith.mulf %107, %104 : vector<16x16xf32>
    %109 = arith.mulf %108, %104 : vector<16x16xf32>
    %110 = arith.mulf %109, %104 : vector<16x16xf32>
    %111 = arith.addf %104, %110 : vector<16x16xf32>
    %cst_49 = arith.constant 0.797884583 : f32
    %112 = vector.broadcast %cst_49 : f32 to vector<16x16xf32>
    %113 = arith.mulf %112, %111 : vector<16x16xf32>
    %114 = math.tanh %113 : vector<16x16xf32>
    %cst_50 = arith.constant 1.000000e+00 : f32
    %115 = vector.broadcast %cst_50 : f32 to vector<16x16xf32>
    %116 = arith.addf %115, %114 : vector<16x16xf32>
    %117 = arith.mulf %106, %116 : vector<16x16xf32>
    %118 = arith.truncf %117 : vector<16x16xf32> to vector<16x16xbf16>
    %c0_51 = arith.constant 0 : index
    %c0_52 = arith.constant 0 : index
    %c0_53 = arith.constant 0 : index
    %119 = vector.load %arg10[%c0_51, %c0_52, %c0_53] : memref<2x16x32xf32, #tpu.memory_space<vmem>>, vector<1x16x32xf32>
    %120 = vector.shape_cast %119 : vector<1x16x32xf32> to vector<16x32xf32>
    %121 = arith.truncf %120 : vector<16x32xf32> to vector<16x32xbf16>
    %cst_54 = arith.constant dense<0.000000e+00> : vector<16x32xf32>
    %122 = tpu.matmul %118, %121, %cst_54 {dimension_numbers = #tpu.dot_dimension_numbers<[1], [0], [0], [1], [0, 0, 1, 1], [], []>} : vector<16x16xbf16>, vector<16x32xbf16>, vector<16x32xf32> -> vector<16x32xf32>
    %c0_55 = arith.constant 0 : index
    %c0_56 = arith.constant 0 : index
    %c0_57 = arith.constant 0 : index
    %123 = vector.load %arg11[%c0_55, %c0_56, %c0_57] : memref<2x1x32xf32, #tpu.memory_space<vmem>>, vector<1x1x32xf32>
    %124 = vector.shape_cast %123 : vector<1x1x32xf32> to vector<1x32xf32>
    %125 = vector.broadcast %124 : vector<1x32xf32> to vector<16x32xf32>
    %126 = arith.addf %122, %125 : vector<16x32xf32>
    %127 = arith.addf %69, %126 : vector<16x32xf32>
    %c2 = arith.constant 2 : index
    %c0_58 = arith.constant 0 : index
    %c0_59 = arith.constant 0 : index
    %128 = vector.load %arg2[%c2, %c0_58, %c0_59] : memref<5x1x32xf32, #tpu.memory_space<vmem>>, vector<1x1x32xf32>
    %129 = vector.shape_cast %128 : vector<1x1x32xf32> to vector<1x32xf32>
    %c2_60 = arith.constant 2 : index
    %c0_61 = arith.constant 0 : index
    %c0_62 = arith.constant 0 : index
    %130 = vector.load %arg3[%c2_60, %c0_61, %c0_62] : memref<5x1x32xf32, #tpu.memory_space<vmem>>, vector<1x1x32xf32>
    %131 = vector.shape_cast %130 : vector<1x1x32xf32> to vector<1x32xf32>
    %cst_63 = arith.constant dense<0.000000e+00> : vector<16xf32>
    %132 = vector.multi_reduction <add>, %127, %cst_63 [1] : vector<16x32xf32> to vector<16xf32>
    %133 = vector.shape_cast %132 : vector<16xf32> to vector<16x1xf32>
    %cst_64 = arith.constant 3.200000e+01 : f32
    %134 = vector.broadcast %cst_64 : f32 to vector<16x1xf32>
    %135 = arith.divf %133, %134 : vector<16x1xf32>
    %136 = vector.broadcast %135 : vector<16x1xf32> to vector<16x32xf32>
    %137 = arith.subf %127, %136 : vector<16x32xf32>
    %138 = arith.mulf %137, %137 : vector<16x32xf32>
    %cst_65 = arith.constant dense<0.000000e+00> : vector<16xf32>
    %139 = vector.multi_reduction <add>, %138, %cst_65 [1] : vector<16x32xf32> to vector<16xf32>
    %140 = vector.shape_cast %139 : vector<16xf32> to vector<16x1xf32>
    %cst_66 = arith.constant 3.200000e+01 : f32
    %141 = vector.broadcast %cst_66 : f32 to vector<16x1xf32>
    %142 = arith.divf %140, %141 : vector<16x1xf32>
    %143 = vector.broadcast %135 : vector<16x1xf32> to vector<16x32xf32>
    %144 = arith.subf %127, %143 : vector<16x32xf32>
    %cst_67 = arith.constant 9.99999974E-6 : f32
    %145 = vector.broadcast %cst_67 : f32 to vector<16x1xf32>
    %146 = arith.addf %142, %145 : vector<16x1xf32>
    %147 = math.rsqrt %146 : vector<16x1xf32>
    %148 = vector.broadcast %147 : vector<16x1xf32> to vector<16x32xf32>
    %149 = arith.mulf %144, %148 : vector<16x32xf32>
    %150 = vector.broadcast %129 : vector<1x32xf32> to vector<16x32xf32>
    %151 = arith.mulf %149, %150 : vector<16x32xf32>
    %152 = vector.broadcast %131 : vector<1x32xf32> to vector<16x32xf32>
    %153 = arith.addf %151, %152 : vector<16x32xf32>
    %154 = vector.shape_cast %153 : vector<16x32xf32> to vector<2x8x32xf32>
    %155 = arith.truncf %154 : vector<2x8x32xf32> to vector<2x8x32xbf16>
    %c1_68 = arith.constant 1 : index
    %c0_69 = arith.constant 0 : index
    %c0_70 = arith.constant 0 : index
    %156 = vector.load %arg4[%c1_68, %c0_69, %c0_70] : memref<2x32x8xf32, #tpu.memory_space<vmem>>, vector<1x32x8xf32>
    %157 = vector.shape_cast %156 : vector<1x32x8xf32> to vector<32x8xf32>
    %158 = arith.truncf %157 : vector<32x8xf32> to vector<32x8xbf16>
    %159 = vector.shape_cast %158 : vector<32x8xbf16> to vector<1x32x8xbf16>
    %160 = vector.shape_cast %159 : vector<1x32x8xbf16> to vector<1x32x8xbf16>
    %161 = vector.broadcast %160 : vector<1x32x8xbf16> to vector<2x32x8xbf16>
    "tpu.trace_start"() <{level = 10 : i32, message = "bqp,bpd->bqd"}> : () -> ()
    %cst_71 = arith.constant dense<0.000000e+00> : vector<2x32x32xf32>
    %162 = tpu.matmul %161, %155, %cst_71 {dimension_numbers = #tpu.dot_dimension_numbers<[2], [1], [1], [2], [0, 0, 0, 1, 1, 2], [0], [0]>} : vector<2x32x8xbf16>, vector<2x8x32xbf16>, vector<2x32x32xf32> -> vector<2x32x32xf32>
    "tpu.trace_stop"() : () -> ()
    %c1_72 = arith.constant 1 : index
    %c0_73 = arith.constant 0 : index
    %c0_74 = arith.constant 0 : index
    %163 = vector.load %arg5[%c1_72, %c0_73, %c0_74] : memref<2x32x1xf32, #tpu.memory_space<vmem>>, vector<1x32x1xf32>
    %164 = vector.shape_cast %163 : vector<1x32x1xf32> to vector<32x1xf32>
    %165 = vector.shape_cast %164 : vector<32x1xf32> to vector<1x32x1xf32>
    %166 = vector.broadcast %165 : vector<1x32x1xf32> to vector<2x32x32xf32>
    %167 = arith.addf %162, %166 : vector<2x32x32xf32>
    %cst_75 = arith.constant 5.000000e-01 : f32
    %168 = vector.broadcast %cst_75 : f32 to vector<2x32x32xf32>
    %169 = arith.mulf %168, %167 : vector<2x32x32xf32>
    %cst_76 = arith.constant 4.471500e-02 : f32
    %170 = vector.broadcast %cst_76 : f32 to vector<2x32x32xf32>
    %171 = arith.mulf %170, %167 : vector<2x32x32xf32>
    %172 = arith.mulf %171, %167 : vector<2x32x32xf32>
    %173 = arith.mulf %172, %167 : vector<2x32x32xf32>
    %174 = arith.addf %167, %173 : vector<2x32x32xf32>
    %cst_77 = arith.constant 0.797884583 : f32
    %175 = vector.broadcast %cst_77 : f32 to vector<2x32x32xf32>
    %176 = arith.mulf %175, %174 : vector<2x32x32xf32>
    %177 = math.tanh %176 : vector<2x32x32xf32>
    %cst_78 = arith.constant 1.000000e+00 : f32
    %178 = vector.broadcast %cst_78 : f32 to vector<2x32x32xf32>
    %179 = arith.addf %178, %177 : vector<2x32x32xf32>
    %180 = arith.mulf %169, %179 : vector<2x32x32xf32>
    %181 = arith.truncf %180 : vector<2x32x32xf32> to vector<2x32x32xbf16>
    %c1_79 = arith.constant 1 : index
    %c0_80 = arith.constant 0 : index
    %c0_81 = arith.constant 0 : index
    %182 = vector.load %arg6[%c1_79, %c0_80, %c0_81] : memref<2x8x32xf32, #tpu.memory_space<vmem>>, vector<1x8x32xf32>
    %183 = vector.shape_cast %182 : vector<1x8x32xf32> to vector<8x32xf32>
    %184 = arith.truncf %183 : vector<8x32xf32> to vector<8x32xbf16>
    %185 = vector.shape_cast %184 : vector<8x32xbf16> to vector<1x8x32xbf16>
    %186 = vector.shape_cast %185 : vector<1x8x32xbf16> to vector<1x8x32xbf16>
    %187 = vector.broadcast %186 : vector<1x8x32xbf16> to vector<2x8x32xbf16>
    "tpu.trace_start"() <{level = 10 : i32, message = "bpq,bqd->bpd"}> : () -> ()
    %cst_82 = arith.constant dense<0.000000e+00> : vector<2x8x32xf32>
    %188 = tpu.matmul %187, %181, %cst_82 {dimension_numbers = #tpu.dot_dimension_numbers<[2], [1], [1], [2], [0, 0, 0, 1, 1, 2], [0], [0]>} : vector<2x8x32xbf16>, vector<2x32x32xbf16>, vector<2x8x32xf32> -> vector<2x8x32xf32>
    "tpu.trace_stop"() : () -> ()
    %c1_83 = arith.constant 1 : index
    %c0_84 = arith.constant 0 : index
    %c0_85 = arith.constant 0 : index
    %189 = vector.load %arg7[%c1_83, %c0_84, %c0_85] : memref<2x8x1xf32, #tpu.memory_space<vmem>>, vector<1x8x1xf32>
    %190 = vector.shape_cast %189 : vector<1x8x1xf32> to vector<8x1xf32>
    %191 = vector.shape_cast %190 : vector<8x1xf32> to vector<1x8x1xf32>
    %192 = vector.broadcast %191 : vector<1x8x1xf32> to vector<2x8x32xf32>
    %193 = arith.addf %188, %192 : vector<2x8x32xf32>
    %194 = vector.shape_cast %193 : vector<2x8x32xf32> to vector<16x32xf32>
    %195 = arith.addf %127, %194 : vector<16x32xf32>
    %c3 = arith.constant 3 : index
    %c0_86 = arith.constant 0 : index
    %c0_87 = arith.constant 0 : index
    %196 = vector.load %arg2[%c3, %c0_86, %c0_87] : memref<5x1x32xf32, #tpu.memory_space<vmem>>, vector<1x1x32xf32>
    %197 = vector.shape_cast %196 : vector<1x1x32xf32> to vector<1x32xf32>
    %c3_88 = arith.constant 3 : index
    %c0_89 = arith.constant 0 : index
    %c0_90 = arith.constant 0 : index
    %198 = vector.load %arg3[%c3_88, %c0_89, %c0_90] : memref<5x1x32xf32, #tpu.memory_space<vmem>>, vector<1x1x32xf32>
    %199 = vector.shape_cast %198 : vector<1x1x32xf32> to vector<1x32xf32>
    %cst_91 = arith.constant dense<0.000000e+00> : vector<16xf32>
    %200 = vector.multi_reduction <add>, %195, %cst_91 [1] : vector<16x32xf32> to vector<16xf32>
    %201 = vector.shape_cast %200 : vector<16xf32> to vector<16x1xf32>
    %cst_92 = arith.constant 3.200000e+01 : f32
    %202 = vector.broadcast %cst_92 : f32 to vector<16x1xf32>
    %203 = arith.divf %201, %202 : vector<16x1xf32>
    %204 = vector.broadcast %203 : vector<16x1xf32> to vector<16x32xf32>
    %205 = arith.subf %195, %204 : vector<16x32xf32>
    %206 = arith.mulf %205, %205 : vector<16x32xf32>
    %cst_93 = arith.constant dense<0.000000e+00> : vector<16xf32>
    %207 = vector.multi_reduction <add>, %206, %cst_93 [1] : vector<16x32xf32> to vector<16xf32>
    %208 = vector.shape_cast %207 : vector<16xf32> to vector<16x1xf32>
    %cst_94 = arith.constant 3.200000e+01 : f32
    %209 = vector.broadcast %cst_94 : f32 to vector<16x1xf32>
    %210 = arith.divf %208, %209 : vector<16x1xf32>
    %211 = vector.broadcast %203 : vector<16x1xf32> to vector<16x32xf32>
    %212 = arith.subf %195, %211 : vector<16x32xf32>
    %cst_95 = arith.constant 9.99999974E-6 : f32
    %213 = vector.broadcast %cst_95 : f32 to vector<16x1xf32>
    %214 = arith.addf %210, %213 : vector<16x1xf32>
    %215 = math.rsqrt %214 : vector<16x1xf32>
    %216 = vector.broadcast %215 : vector<16x1xf32> to vector<16x32xf32>
    %217 = arith.mulf %212, %216 : vector<16x32xf32>
    %218 = vector.broadcast %197 : vector<1x32xf32> to vector<16x32xf32>
    %219 = arith.mulf %217, %218 : vector<16x32xf32>
    %220 = vector.broadcast %199 : vector<1x32xf32> to vector<16x32xf32>
    %221 = arith.addf %219, %220 : vector<16x32xf32>
    %222 = arith.truncf %221 : vector<16x32xf32> to vector<16x32xbf16>
    %c1_96 = arith.constant 1 : index
    %c0_97 = arith.constant 0 : index
    %c0_98 = arith.constant 0 : index
    %223 = vector.load %arg8[%c1_96, %c0_97, %c0_98] : memref<2x32x16xf32, #tpu.memory_space<vmem>>, vector<1x32x16xf32>
    %224 = vector.shape_cast %223 : vector<1x32x16xf32> to vector<32x16xf32>
    %225 = arith.truncf %224 : vector<32x16xf32> to vector<32x16xbf16>
    %cst_99 = arith.constant dense<0.000000e+00> : vector<16x16xf32>
    %226 = tpu.matmul %222, %225, %cst_99 {dimension_numbers = #tpu.dot_dimension_numbers<[1], [0], [0], [1], [0, 0, 1, 1], [], []>} : vector<16x32xbf16>, vector<32x16xbf16>, vector<16x16xf32> -> vector<16x16xf32>
    %c1_100 = arith.constant 1 : index
    %c0_101 = arith.constant 0 : index
    %c0_102 = arith.constant 0 : index
    %227 = vector.load %arg9[%c1_100, %c0_101, %c0_102] : memref<2x1x16xf32, #tpu.memory_space<vmem>>, vector<1x1x16xf32>
    %228 = vector.shape_cast %227 : vector<1x1x16xf32> to vector<1x16xf32>
    %229 = vector.broadcast %228 : vector<1x16xf32> to vector<16x16xf32>
    %230 = arith.addf %226, %229 : vector<16x16xf32>
    %cst_103 = arith.constant 5.000000e-01 : f32
    %231 = vector.broadcast %cst_103 : f32 to vector<16x16xf32>
    %232 = arith.mulf %231, %230 : vector<16x16xf32>
    %cst_104 = arith.constant 4.471500e-02 : f32
    %233 = vector.broadcast %cst_104 : f32 to vector<16x16xf32>
    %234 = arith.mulf %233, %230 : vector<16x16xf32>
    %235 = arith.mulf %234, %230 : vector<16x16xf32>
    %236 = arith.mulf %235, %230 : vector<16x16xf32>
    %237 = arith.addf %230, %236 : vector<16x16xf32>
    %cst_105 = arith.constant 0.797884583 : f32
    %238 = vector.broadcast %cst_105 : f32 to vector<16x16xf32>
    %239 = arith.mulf %238, %237 : vector<16x16xf32>
    %240 = math.tanh %239 : vector<16x16xf32>
    %cst_106 = arith.constant 1.000000e+00 : f32
    %241 = vector.broadcast %cst_106 : f32 to vector<16x16xf32>
    %242 = arith.addf %241, %240 : vector<16x16xf32>
    %243 = arith.mulf %232, %242 : vector<16x16xf32>
    %244 = arith.truncf %243 : vector<16x16xf32> to vector<16x16xbf16>
    %c1_107 = arith.constant 1 : index
    %c0_108 = arith.constant 0 : index
    %c0_109 = arith.constant 0 : index
    %245 = vector.load %arg10[%c1_107, %c0_108, %c0_109] : memref<2x16x32xf32, #tpu.memory_space<vmem>>, vector<1x16x32xf32>
    %246 = vector.shape_cast %245 : vector<1x16x32xf32> to vector<16x32xf32>
    %247 = arith.truncf %246 : vector<16x32xf32> to vector<16x32xbf16>
    %cst_110 = arith.constant dense<0.000000e+00> : vector<16x32xf32>
    %248 = tpu.matmul %244, %247, %cst_110 {dimension_numbers = #tpu.dot_dimension_numbers<[1], [0], [0], [1], [0, 0, 1, 1], [], []>} : vector<16x16xbf16>, vector<16x32xbf16>, vector<16x32xf32> -> vector<16x32xf32>
    %c1_111 = arith.constant 1 : index
    %c0_112 = arith.constant 0 : index
    %c0_113 = arith.constant 0 : index
    %249 = vector.load %arg11[%c1_111, %c0_112, %c0_113] : memref<2x1x32xf32, #tpu.memory_space<vmem>>, vector<1x1x32xf32>
    %250 = vector.shape_cast %249 : vector<1x1x32xf32> to vector<1x32xf32>
    %251 = vector.broadcast %250 : vector<1x32xf32> to vector<16x32xf32>
    %252 = arith.addf %248, %251 : vector<16x32xf32>
    %253 = arith.addf %195, %252 : vector<16x32xf32>
    %c4 = arith.constant 4 : index
    %c0_114 = arith.constant 0 : index
    %c0_115 = arith.constant 0 : index
    %254 = vector.load %arg2[%c4, %c0_114, %c0_115] : memref<5x1x32xf32, #tpu.memory_space<vmem>>, vector<1x1x32xf32>
    %255 = vector.shape_cast %254 : vector<1x1x32xf32> to vector<1x32xf32>
    %c4_116 = arith.constant 4 : index
    %c0_117 = arith.constant 0 : index
    %c0_118 = arith.constant 0 : index
    %256 = vector.load %arg3[%c4_116, %c0_117, %c0_118] : memref<5x1x32xf32, #tpu.memory_space<vmem>>, vector<1x1x32xf32>
    %257 = vector.shape_cast %256 : vector<1x1x32xf32> to vector<1x32xf32>
    %cst_119 = arith.constant dense<0.000000e+00> : vector<16xf32>
    %258 = vector.multi_reduction <add>, %253, %cst_119 [1] : vector<16x32xf32> to vector<16xf32>
    %259 = vector.shape_cast %258 : vector<16xf32> to vector<16x1xf32>
    %cst_120 = arith.constant 3.200000e+01 : f32
    %260 = vector.broadcast %cst_120 : f32 to vector<16x1xf32>
    %261 = arith.divf %259, %260 : vector<16x1xf32>
    %262 = vector.broadcast %261 : vector<16x1xf32> to vector<16x32xf32>
    %263 = arith.subf %253, %262 : vector<16x32xf32>
    %264 = arith.mulf %263, %263 : vector<16x32xf32>
    %cst_121 = arith.constant dense<0.000000e+00> : vector<16xf32>
    %265 = vector.multi_reduction <add>, %264, %cst_121 [1] : vector<16x32xf32> to vector<16xf32>
    %266 = vector.shape_cast %265 : vector<16xf32> to vector<16x1xf32>
    %cst_122 = arith.constant 3.200000e+01 : f32
    %267 = vector.broadcast %cst_122 : f32 to vector<16x1xf32>
    %268 = arith.divf %266, %267 : vector<16x1xf32>
    %269 = vector.broadcast %261 : vector<16x1xf32> to vector<16x32xf32>
    %270 = arith.subf %253, %269 : vector<16x32xf32>
    %cst_123 = arith.constant 9.99999974E-6 : f32
    %271 = vector.broadcast %cst_123 : f32 to vector<16x1xf32>
    %272 = arith.addf %268, %271 : vector<16x1xf32>
    %273 = math.rsqrt %272 : vector<16x1xf32>
    %274 = vector.broadcast %273 : vector<16x1xf32> to vector<16x32xf32>
    %275 = arith.mulf %270, %274 : vector<16x32xf32>
    %276 = vector.broadcast %255 : vector<1x32xf32> to vector<16x32xf32>
    %277 = arith.mulf %275, %276 : vector<16x32xf32>
    %278 = vector.broadcast %257 : vector<1x32xf32> to vector<16x32xf32>
    %279 = arith.addf %277, %278 : vector<16x32xf32>
    %280 = vector.shape_cast %279 : vector<16x32xf32> to vector<2x8x32xf32>
    %cst_124 = arith.constant dense<0.000000e+00> : vector<2x32xf32>
    %281 = vector.multi_reduction <add>, %280, %cst_124 [1] : vector<2x8x32xf32> to vector<2x32xf32>
    %cst_125 = arith.constant 8.000000e+00 : f32
    %282 = vector.broadcast %cst_125 : f32 to vector<2x32xf32>
    %283 = arith.divf %281, %282 : vector<2x32xf32>
    %284 = arith.truncf %283 : vector<2x32xf32> to vector<2x32xbf16>
    %c0_126 = arith.constant 0 : index
    %c0_127 = arith.constant 0 : index
    %285 = vector.load %arg12[%c0_126, %c0_127] : memref<32x128xf32, #tpu.memory_space<vmem>>, vector<32x128xf32>
    %286 = arith.truncf %285 : vector<32x128xf32> to vector<32x128xbf16>
    %cst_128 = arith.constant dense<0.000000e+00> : vector<2x128xf32>
    %287 = tpu.matmul %284, %286, %cst_128 {dimension_numbers = #tpu.dot_dimension_numbers<[1], [0], [0], [1], [0, 0, 1, 1], [], []>} : vector<2x32xbf16>, vector<32x128xbf16>, vector<2x128xf32> -> vector<2x128xf32>
    %c0_129 = arith.constant 0 : index
    %c0_130 = arith.constant 0 : index
    %288 = vector.load %arg13[%c0_129, %c0_130] : memref<1x128xf32, #tpu.memory_space<vmem>>, vector<1x128xf32>
    %289 = vector.broadcast %288 : vector<1x128xf32> to vector<2x128xf32>
    %290 = arith.addf %287, %289 : vector<2x128xf32>
    %cst_131 = arith.constant dense<0xFF800000> : vector<2xf32>
    %291 = vector.multi_reduction <maximumf>, %290, %cst_131 [1] : vector<2x128xf32> to vector<2xf32>
    %292 = vector.shape_cast %291 : vector<2xf32> to vector<2x1xf32>
    %293 = vector.broadcast %292 : vector<2x1xf32> to vector<2x128xf32>
    %294 = arith.subf %290, %293 : vector<2x128xf32>
    %295 = math.exp %294 : vector<2x128xf32>
    %cst_132 = arith.constant dense<0.000000e+00> : vector<2xf32>
    %296 = vector.multi_reduction <add>, %295, %cst_132 [1] : vector<2x128xf32> to vector<2xf32>
    %297 = vector.shape_cast %296 : vector<2xf32> to vector<2x1xf32>
    %298 = tpu.reciprocal %297 {approx = true} : vector<2x1xf32> -> vector<2x1xf32>
    %299 = vector.broadcast %298 : vector<2x1xf32> to vector<2x128xf32>
    %300 = arith.mulf %295, %299 : vector<2x128xf32>
    %c0_133 = arith.constant 0 : index
    %c0_134 = arith.constant 0 : index
    %301 = vector.load %arg14[%c0_133, %c0_134] : memref<2x128xf32, #tpu.memory_space<vmem>>, vector<2x128xf32>
    tpu.vector_store %arg14[%c0_133, %c0_134], %300 {strides = array<i32>} : memref<2x128xf32, #tpu.memory_space<vmem>>, vector<2x128xf32>,
    return
  }
  func.func @transform_0(%arg0: i32) -> (i32, i32, i32) {
    %c0_i32 = arith.constant 0 : i32
    %c0_i32_0 = arith.constant 0 : i32
    %c0_i32_1 = arith.constant 0 : i32
    return %arg0, %c0_i32, %c0_i32_0 : i32, i32, i32
  }
  func.func @transform_1(%arg0: i32) -> (i32, i32, i32) {
    %c0_i32 = arith.constant 0 : i32
    %c0_i32_0 = arith.constant 0 : i32
    %c0_i32_1 = arith.constant 0 : i32
    %c0_i32_2 = arith.constant 0 : i32
    return %c0_i32, %c0_i32_0, %c0_i32_1 : i32, i32, i32
  }
  func.func @transform_2(%arg0: i32) -> (i32, i32, i32) {
    %c0_i32 = arith.constant 0 : i32
    %c0_i32_0 = arith.constant 0 : i32
    %c0_i32_1 = arith.constant 0 : i32
    %c0_i32_2 = arith.constant 0 : i32
    return %c0_i32, %c0_i32_0, %c0_i32_1 : i32, i32, i32
  }
  func.func @transform_3(%arg0: i32) -> (i32, i32, i32) {
    %c0_i32 = arith.constant 0 : i32
    %c0_i32_0 = arith.constant 0 : i32
    %c0_i32_1 = arith.constant 0 : i32
    %c0_i32_2 = arith.constant 0 : i32
    return %c0_i32, %c0_i32_0, %c0_i32_1 : i32, i32, i32
  }
  func.func @transform_4(%arg0: i32) -> (i32, i32, i32) {
    %c0_i32 = arith.constant 0 : i32
    %c0_i32_0 = arith.constant 0 : i32
    %c0_i32_1 = arith.constant 0 : i32
    %c0_i32_2 = arith.constant 0 : i32
    return %c0_i32, %c0_i32_0, %c0_i32_1 : i32, i32, i32
  }
  func.func @transform_5(%arg0: i32) -> (i32, i32, i32) {
    %c0_i32 = arith.constant 0 : i32
    %c0_i32_0 = arith.constant 0 : i32
    %c0_i32_1 = arith.constant 0 : i32
    %c0_i32_2 = arith.constant 0 : i32
    return %c0_i32, %c0_i32_0, %c0_i32_1 : i32, i32, i32
  }
  func.func @transform_6(%arg0: i32) -> (i32, i32, i32) {
    %c0_i32 = arith.constant 0 : i32
    %c0_i32_0 = arith.constant 0 : i32
    %c0_i32_1 = arith.constant 0 : i32
    %c0_i32_2 = arith.constant 0 : i32
    return %c0_i32, %c0_i32_0, %c0_i32_1 : i32, i32, i32
  }
  func.func @transform_7(%arg0: i32) -> (i32, i32, i32) {
    %c0_i32 = arith.constant 0 : i32
    %c0_i32_0 = arith.constant 0 : i32
    %c0_i32_1 = arith.constant 0 : i32
    %c0_i32_2 = arith.constant 0 : i32
    return %c0_i32, %c0_i32_0, %c0_i32_1 : i32, i32, i32
  }
  func.func @transform_8(%arg0: i32) -> (i32, i32, i32) {
    %c0_i32 = arith.constant 0 : i32
    %c0_i32_0 = arith.constant 0 : i32
    %c0_i32_1 = arith.constant 0 : i32
    %c0_i32_2 = arith.constant 0 : i32
    return %c0_i32, %c0_i32_0, %c0_i32_1 : i32, i32, i32
  }
  func.func @transform_9(%arg0: i32) -> (i32, i32, i32) {
    %c0_i32 = arith.constant 0 : i32
    %c0_i32_0 = arith.constant 0 : i32
    %c0_i32_1 = arith.constant 0 : i32
    %c0_i32_2 = arith.constant 0 : i32
    return %c0_i32, %c0_i32_0, %c0_i32_1 : i32, i32, i32
  }
  func.func @transform_10(%arg0: i32) -> (i32, i32, i32) {
    %c0_i32 = arith.constant 0 : i32
    %c0_i32_0 = arith.constant 0 : i32
    %c0_i32_1 = arith.constant 0 : i32
    %c0_i32_2 = arith.constant 0 : i32
    return %c0_i32, %c0_i32_0, %c0_i32_1 : i32, i32, i32
  }
  func.func @transform_11(%arg0: i32) -> (i32, i32) {
    %c0_i32 = arith.constant 0 : i32
    %c0_i32_0 = arith.constant 0 : i32
    %c0_i32_1 = arith.constant 0 : i32
    return %c0_i32, %c0_i32_0 : i32, i32
  }
  func.func @transform_12(%arg0: i32) -> (i32, i32) {
    %c0_i32 = arith.constant 0 : i32
    %c0_i32_0 = arith.constant 0 : i32
    %c0_i32_1 = arith.constant 0 : i32
    return %c0_i32, %c0_i32_0 : i32, i32
  }
  func.func @transform_13(%arg0: i32) -> (i32, i32) {
    %c0_i32 = arith.constant 0 : i32
    %c0_i32_0 = arith.constant 0 : i32
    return %arg0, %c0_i32 : i32, i32
  }
}

</mosaic_0001>

<llo_original>
// kernel: tpu_custom_call.1
$region0: #{tpu_custom_call.1}
  #allocation0 [shape = 'u32[]', space=smem, size = 0x4, offset = 0x4, fixed_abs, tag = 'smem constant byte address 0x4 - core index']
  #allocation1 [shape = 'u32[144,128]{1,0:T(1,128)}', space=vmem, size = 0x12000, scoped, tag = 'internal scratch']
  %s0 = inlined_call_operand.vmem [shape: f32[2,8,32], index: 0, kind: input, shape index: {}]
  %s1 = inlined_call_operand.vmem [shape: f32[5,1,32], index: 1, kind: input, shape index: {}]
  %s2 = inlined_call_operand.vmem [shape: f32[5,1,32], index: 2, kind: input, shape index: {}]
  %s3 = inlined_call_operand.vmem [shape: f32[2,32,8], index: 3, kind: input, shape index: {}]
  %s4 = inlined_call_operand.vmem [shape: f32[2,32,1], index: 4, kind: input, shape index: {}]
  %s5 = inlined_call_operand.vmem [shape: f32[2,8,32], index: 5, kind: input, shape index: {}]
  %s6 = inlined_call_operand.vmem [shape: f32[2,8,1], index: 6, kind: input, shape index: {}]
  %s7 = inlined_call_operand.vmem [shape: f32[2,32,16], index: 7, kind: input, shape index: {}]
  %s8 = inlined_call_operand.vmem [shape: f32[2,1,16], index: 8, kind: input, shape index: {}]
  %s9 = inlined_call_operand.vmem [shape: f32[2,16,32], index: 9, kind: input, shape index: {}]
  %s10 = inlined_call_operand.vmem [shape: f32[2,1,32], index: 10, kind: input, shape index: {}]
  %s11 = inlined_call_operand.vmem [shape: f32[32,128], index: 11, kind: input, shape index: {}]
  %s12 = inlined_call_operand.vmem [shape: f32[1,128], index: 12, kind: input, shape index: {}]
  %s13 = inlined_call_operand.hbm [shape: f32[2,128], index: 13, kind: output, shape index: {}]
  %s14 = sld [smem:[#allocation0]]
  $region62: #{tpu_custom_call.1} parent=0
    _
  %s16 = ssub.s32 1, %s14
  %s17 = scalar_select 0, %s16, %s14
  $region1: #{tpu_custom_call.1} parent=0
    #allocation2 [shape = 'u8[1024]{0}', space=vmem, size = 0x400, scoped, tag = 'output window, operand 0, single buffered']
    #allocation3 [shape = 's32[1]{0}', space=sflag, size = 0x4, scoped, tag = 'scoped memory for tpu_custom_call.1']
    %18 = vsyncpa [#allocation3], 0
    // Predicated region
    $region2: #{tpu_custom_call.1} parent=1 // pred_check
      _
    $region3: #{tpu_custom_call.1} parent=1 // pred_check_branch
      %20 = sbr.rel (0) target = $region5
    $region4: #{tpu_custom_call.1} parent=1 // pred_region
      _
    $region5: #{tpu_custom_call.1} parent=1 // pred_fallthru
      _
    // Predicated region
    $region6: #{tpu_custom_call.1} parent=1 // pred_check
      _
    $region7: #{tpu_custom_call.1} parent=1 // pred_check_branch
      %22 = sbr.rel (0) target = $region9
    $region8: #{tpu_custom_call.1} parent=1 // pred_region
      _
    $region9: #{tpu_custom_call.1} parent=1 // pred_fallthru
      _
    // Predicated region
    $region10: #{tpu_custom_call.1} parent=1 // pred_check
      _
    $region11: #{tpu_custom_call.1} parent=1 // pred_check_branch
      %24 = sbr.rel (0) target = $region13
    $region12: #{tpu_custom_call.1} parent=1 // pred_region
      _
    $region13: #{tpu_custom_call.1} parent=1 // pred_fallthru
      _
    // Predicated region
    $region14: #{tpu_custom_call.1} parent=1 // pred_check
      _
    $region15: #{tpu_custom_call.1} parent=1 // pred_check_branch
      %26 = sbr.rel (0) target = $region17
    $region16: #{tpu_custom_call.1} parent=1 // pred_region
      _
    $region17: #{tpu_custom_call.1} parent=1 // pred_fallthru
      _
    // Predicated region
    $region18: #{tpu_custom_call.1} parent=1 // pred_check
      _
    $region19: #{tpu_custom_call.1} parent=1 // pred_check_branch
      %28 = sbr.rel (0) target = $region21
    $region20: #{tpu_custom_call.1} parent=1 // pred_region
      _
    $region21: #{tpu_custom_call.1} parent=1 // pred_fallthru
      _
    // Predicated region
    $region22: #{tpu_custom_call.1} parent=1 // pred_check
      _
    $region23: #{tpu_custom_call.1} parent=1 // pred_check_branch
      %30 = sbr.rel (0) target = $region25
    $region24: #{tpu_custom_call.1} parent=1 // pred_region
      _
    $region25: #{tpu_custom_call.1} parent=1 // pred_fallthru
      _
    // Predicated region
    $region26: #{tpu_custom_call.1} parent=1 // pred_check
      _
    $region27: #{tpu_custom_call.1} parent=1 // pred_check_branch
      %32 = sbr.rel (0) target = $region29
    $region28: #{tpu_custom_call.1} parent=1 // pred_region
      _
    $region29: #{tpu_custom_call.1} parent=1 // pred_fallthru
      _
    // Predicated region
    $region30: #{tpu_custom_call.1} parent=1 // pred_check
      _
    $region31: #{tpu_custom_call.1} parent=1 // pred_check_branch
      %34 = sbr.rel (0) target = $region33
    $region32: #{tpu_custom_call.1} parent=1 // pred_region
      _
    $region33: #{tpu_custom_call.1} parent=1 // pred_fallthru
      _
    // Predicated region
    $region34: #{tpu_custom_call.1} parent=1 // pred_check
      _
    $region35: #{tpu_custom_call.1} parent=1 // pred_check_branch
      %36 = sbr.rel (0) target = $region37
    $region36: #{tpu_custom_call.1} parent=1 // pred_region
      _
    $region37: #{tpu_custom_call.1} parent=1 // pred_fallthru
      _
    // Predicated region
    $region38: #{tpu_custom_call.1} parent=1 // pred_check
      _
    $region39: #{tpu_custom_call.1} parent=1 // pred_check_branch
      %38 = sbr.rel (0) target = $region41
    $region40: #{tpu_custom_call.1} parent=1 // pred_region
      _
    $region41: #{tpu_custom_call.1} parent=1 // pred_fallthru
      _
    // Predicated region
    $region42: #{tpu_custom_call.1} parent=1 // pred_check
      _
    $region43: #{tpu_custom_call.1} parent=1 // pred_check_branch
      %40 = sbr.rel (0) target = $region45
    $region44: #{tpu_custom_call.1} parent=1 // pred_region
      _
    $region45: #{tpu_custom_call.1} parent=1 // pred_fallthru
      _
    // Predicated region
    $region46: #{tpu_custom_call.1} parent=1 // pred_check
      _
    $region47: #{tpu_custom_call.1} parent=1 // pred_check_branch
      %42 = sbr.rel (0) target = $region49
    $region48: #{tpu_custom_call.1} parent=1 // pred_region
      _
    $region49: #{tpu_custom_call.1} parent=1 // pred_fallthru
      _
    // Predicated region
    $region50: #{tpu_custom_call.1} parent=1 // pred_check
      _
    $region51: #{tpu_custom_call.1} parent=1 // pred_check_branch
      %44 = sbr.rel (0) target = $region53
    $region52: #{tpu_custom_call.1} parent=1 // pred_region
      _
    $region53: #{tpu_custom_call.1} parent=1 // pred_fallthru
      _
    %v46 = vld [vmem:[%s0] sm:$0xff]
    %v47 = vld [vmem:[%s0 + $0x8] sm:$0xff]
    %v48 = vld [vmem:[%s1] sm:$0x1]
    %v49 = vld [vmem:[%s2] sm:$0x1]
    %vm50 = vcmask 261120
    %v51 = vsel %vm50, %v46, 0.0
    %52 = vadd.xlane.f32.xlu0 %v51
    %v53 = vpop.xlane.xlu0 %52
    %v54 = vsel %vm50, %v47, 0.0
    %55 = vadd.xlane.f32.xlu0 %v54
    %v56 = vpop.xlane.xlu0 %55
    %v57 = vrcp.pop 32.0
    %v58 = vmul.f32 %v53, %v57
    %v59 = vmul.f32 %v56, %v57
    %v60 = vsub.f32 %v46, %v58
    %v61 = vsub.f32 %v47, %v59
    %v62 = vmul.f32 %v60, %v60
    %v63 = vmul.f32 %v61, %v61
    %v64 = vsel %vm50, %v62, 0.0
    %65 = vadd.xlane.f32.xlu0 %v64
    %v66 = vpop.xlane.xlu0 %65
    %v67 = vsel %vm50, %v63, 0.0
    %68 = vadd.xlane.f32.xlu0 %v67
    %v69 = vpop.xlane.xlu0 %68
    %v70 = vmul.f32 %v66, %v57
    %v71 = vmul.f32 %v69, %v57
    %v72 = vadd.f32 %v70, 1e-05
    %v73 = vadd.f32 %v71, 1e-05
    %v74 = vrsqrt.pop %v72
    %v75 = vrsqrt.pop %v73
    %v76 = vmul.f32 %v60, %v74
    %v77 = vmul.f32 %v61, %v75
    %v79 = vlaneseq
    %v80 = vshrl.u32 %v79, 7
    %v81 = vsub.s32 0, %v80
    %v82 = vrot.slane %v48, %v81
    %v84 = vmul.f32 %v76, %v82
    %v85 = vmul.f32 %v77, %v82
    %v87 = vlaneseq
    %v88 = vshrl.u32 %v87, 7
    %v89 = vsub.s32 0, %v88
    %v90 = vrot.slane %v49, %v89
    %v92 = vadd.f32 %v84, %v90
    %v93 = vadd.f32 %v85, %v90
    %v94 = vpack.c.bf16 %v92, %v92
    %v95 = vpack.c.bf16 %v93, %v93
    %v96 = vld [vmem:[%s3] sm:$0xff]
    %v97 = vld [vmem:[%s3 + $0x8] sm:$0xff]
    %v98 = vld [vmem:[%s3 + $0x10] sm:$0xff]
    %v99 = vld [vmem:[%s3 + $0x18] sm:$0xff]
    %v100 = vpack.c.bf16 %v97, %v96
    %v101 = vpack.c.bf16 %v99, %v98
    %v102 = vld [vmem:[%s4] sm:$0xff]
    %v103 = vld [vmem:[%s4 + $0x8] sm:$0xff]
    %v104 = vld [vmem:[%s4 + $0x10] sm:$0xff]
    %v105 = vld [vmem:[%s4 + $0x18] sm:$0xff]
    %107 = vset.pattern.permute.xlu0 0
    %108 = vperm.xlu0 %107, %v102
    %v109 = vpop.permute.xlu0 %108
    %112 = vset.pattern.permute.xlu0 0
    %113 = vperm.xlu0 %112, %v103
    %v114 = vpop.permute.xlu0 %113
    %117 = vset.pattern.permute.xlu0 0
    %118 = vperm.xlu0 %117, %v104
    %v119 = vpop.permute.xlu0 %118
    %122 = vset.pattern.permute.xlu0 0
    %123 = vperm.xlu0 %122, %v105
    %v124 = vpop.permute.xlu0 %123
    %vm126 = vcmask 64512
    %v128 = vsel %vm126, %v100, 0
    %v131 = vsel %vm126, %v101, 0
    %vm133 = vcmask 1043456
    %v135 = vsel %vm133, %v94, 0
    %137 = vmatprep.subr.bf16.mxu0 0
    %138 = vmatpush1.bf16.msra.mxu0 %v135
    %139 = vmatprep.subr.bf16.mxu0 0
    %140 = vmatpush1.bf16.msra.mxu0 0
    %141 = vmatprep.subr.bf16.mxu0 0
    %142 = vmatpush1.bf16.msra.mxu0 0
    %143 = vmatprep.subr.bf16.mxu0 0
    %144 = vmatpush1.bf16.msra.mxu0 0
    %145 = vmatprep.subr.bf16.mxu0 0
    %146 = vmatpush1.bf16.msra.mxu0 0
    %147 = vmatprep.subr.bf16.mxu0 0
    %148 = vmatpush1.bf16.msra.mxu0 0
    %149 = vmatprep.subr.bf16.mxu0 0
    %150 = vmatpush1.bf16.msra.mxu0 0
    %151 = vmatprep.subr.bf16.mxu0 0
    %152 = vmatpush1.bf16.msra.mxu0 0
    %153 = vmatprep.subr.bf16.mxu0 0
    %154 = vmatpush1.bf16.msra.mxu0 0
    %155 = vmatprep.subr.bf16.mxu0 0
    %156 = vmatpush1.bf16.msra.mxu0 0
    %157 = vmatprep.subr.bf16.mxu0 0
    %158 = vmatpush1.bf16.msra.mxu0 0
    %159 = vmatprep.subr.bf16.mxu0 0
    %160 = vmatpush1.bf16.msra.mxu0 0
    %161 = vmatprep.subr.bf16.mxu0 0
    %162 = vmatpush1.bf16.msra.mxu0 0
    %163 = vmatprep.subr.bf16.mxu0 0
    %164 = vmatpush1.bf16.msra.mxu0 0
    %165 = vmatprep.subr.bf16.mxu0 0
    %166 = vmatpush1.bf16.msra.mxu0 0
    %167 = vmatprep.subr.bf16.mxu0 0
    %168 = vmatpush1.bf16.msra.mxu0 0
    %169 = vmatprep.mubr.bf16.mxu0 0
    %170 = vmatmul.mubr.bf16.gmra.mrb[0].mxu0 %v128
    %v171 = vpop.f32.mrb[0].mxu0
    %v172 = vadd.f32 %v109, %v171
    %v173 = vpop.f32.mrb[0].mxu0
    %v174 = vpop.f32.mrb[0].mxu0
    %v175 = vadd.f32 %v114, %v174
    %v176 = vpop.f32.mrb[0].mxu0
    %177 = vmatprep.mubr.bf16.mxu0 0
    %178 = vmatmul.mubr.bf16.gmra.mrb[0].mxu0 %v131
    %v179 = vpop.f32.mrb[0].mxu0
    %v180 = vadd.f32 %v119, %v179
    %v181 = vpop.f32.mrb[0].mxu0
    %v182 = vpop.f32.mrb[0].mxu0
    %v183 = vadd.f32 %v124, %v182
    %v184 = vpop.f32.mrb[0].mxu0
    %185 = vdwg.mxu0
    %v187 = vsel %vm133, %v95, 0
    %189 = vmatprep.subr.bf16.mxu0 0
    %190 = vmatpush1.bf16.msra.mxu0 %v187
    %191 = vmatprep.subr.bf16.mxu0 0
    %192 = vmatpush1.bf16.msra.mxu0 0
    %193 = vmatprep.subr.bf16.mxu0 0
    %194 = vmatpush1.bf16.msra.mxu0 0
    %195 = vmatprep.subr.bf16.mxu0 0
    %196 = vmatpush1.bf16.msra.mxu0 0
    %197 = vmatprep.subr.bf16.mxu0 0
    %198 = vmatpush1.bf16.msra.mxu0 0
    %199 = vmatprep.subr.bf16.mxu0 0
    %200 = vmatpush1.bf16.msra.mxu0 0
    %201 = vmatprep.subr.bf16.mxu0 0
    %202 = vmatpush1.bf16.msra.mxu0 0
    %203 = vmatprep.subr.bf16.mxu0 0
    %204 = vmatpush1.bf16.msra.mxu0 0
    %205 = vmatprep.subr.bf16.mxu0 0
    %206 = vmatpush1.bf16.msra.mxu0 0
    %207 = vmatprep.subr.bf16.mxu0 0
    %208 = vmatpush1.bf16.msra.mxu0 0
    %209 = vmatprep.subr.bf16.mxu0 0
    %210 = vmatpush1.bf16.msra.mxu0 0
    %211 = vmatprep.subr.bf16.mxu0 0
    %212 = vmatpush1.bf16.msra.mxu0 0
    %213 = vmatprep.subr.bf16.mxu0 0
    %214 = vmatpush1.bf16.msra.mxu0 0
    %215 = vmatprep.subr.bf16.mxu0 0
    %216 = vmatpush1.bf16.msra.mxu0 0
    %217 = vmatprep.subr.bf16.mxu0 0
    %218 = vmatpush1.bf16.msra.mxu0 0
    %219 = vmatprep.subr.bf16.mxu0 0
    %220 = vmatpush1.bf16.msra.mxu0 0
    %221 = vmatprep.mubr.bf16.mxu0 0
    %222 = vmatmul.mubr.bf16.gmra.mrb[0].mxu0 %v128
    %v223 = vpop.f32.mrb[0].mxu0
    %v224 = vadd.f32 %v109, %v223
    %v225 = vpop.f32.mrb[0].mxu0
    %v226 = vpop.f32.mrb[0].mxu0
    %v227 = vadd.f32 %v114, %v226
    %v228 = vpop.f32.mrb[0].mxu0
    %229 = vmatprep.mubr.bf16.mxu0 0
    %230 = vmatmul.mubr.bf16.gmra.mrb[0].mxu0 %v131
    %v231 = vpop.f32.mrb[0].mxu0
    %v232 = vadd.f32 %v119, %v231
    %v233 = vpop.f32.mrb[0].mxu0
    %v234 = vpop.f32.mrb[0].mxu0
    %v235 = vadd.f32 %v124, %v234
    %v236 = vpop.f32.mrb[0].mxu0
    %237 = vdwg.mxu0
    %v238 = vmul.f32 %v172, 0.5
    %v239 = vmul.f32 %v175, 0.5
    %v240 = vmul.f32 %v180, 0.5
    %v241 = vmul.f32 %v183, 0.5
    %v242 = vmul.f32 %v224, 0.5
    %v243 = vmul.f32 %v227, 0.5
    %v244 = vmul.f32 %v232, 0.5
    %v245 = vmul.f32 %v235, 0.5
    %v246 = vmul.f32 %v172, 0.044715
    %v247 = vmul.f32 %v175, 0.044715
    %v248 = vmul.f32 %v180, 0.044715
    %v249 = vmul.f32 %v183, 0.044715
    %v250 = vmul.f32 %v224, 0.044715
    %v251 = vmul.f32 %v227, 0.044715
    %v252 = vmul.f32 %v232, 0.044715
    %v253 = vmul.f32 %v235, 0.044715
    %v254 = vmul.f32 %v246, %v172
    %v255 = vmul.f32 %v247, %v175
    %v256 = vmul.f32 %v248, %v180
    %v257 = vmul.f32 %v249, %v183
    %v258 = vmul.f32 %v250, %v224
    %v259 = vmul.f32 %v251, %v227
    %v260 = vmul.f32 %v252, %v232
    %v261 = vmul.f32 %v253, %v235
    %v262 = vmul.f32 %v254, %v172
    %v263 = vmul.f32 %v255, %v175
    %v264 = vmul.f32 %v256, %v180
    %v265 = vmul.f32 %v257, %v183
    %v266 = vmul.f32 %v258, %v224
    %v267 = vmul.f32 %v259, %v227
    %v268 = vmul.f32 %v260, %v232
    %v269 = vmul.f32 %v261, %v235
    %v270 = vadd.f32 %v172, %v262
    %v271 = vadd.f32 %v175, %v263
    %v272 = vadd.f32 %v180, %v264
    %v273 = vadd.f32 %v183, %v265
    %v274 = vadd.f32 %v224, %v266
    %v275 = vadd.f32 %v227, %v267
    %v276 = vadd.f32 %v232, %v268
    %v277 = vadd.f32 %v235, %v269
    %v278 = vmul.f32 %v270, 0.7978846
    %v279 = vmul.f32 %v271, 0.7978846
    %v280 = vmul.f32 %v272, 0.7978846
    %v281 = vmul.f32 %v273, 0.7978846
    %v282 = vmul.f32 %v274, 0.7978846
    %v283 = vmul.f32 %v275, 0.7978846
    %v284 = vmul.f32 %v276, 0.7978846
    %v285 = vmul.f32 %v277, 0.7978846
    %v286 = vtanh.pop %v278
    %v287 = vtanh.pop %v279
    %v288 = vtanh.pop %v280
    %v289 = vtanh.pop %v281
    %v290 = vtanh.pop %v282
    %v291 = vtanh.pop %v283
    %v292 = vtanh.pop %v284
    %v293 = vtanh.pop %v285
    %v294 = vadd.f32 %v286, 1.0
    %v295 = vadd.f32 %v287, 1.0
    %v296 = vadd.f32 %v288, 1.0
    %v297 = vadd.f32 %v289, 1.0
    %v298 = vadd.f32 %v290, 1.0
    %v299 = vadd.f32 %v291, 1.0
    %v300 = vadd.f32 %v292, 1.0
    %v301 = vadd.f32 %v293, 1.0
    %v302 = vmul.f32 %v238, %v294
    %v303 = vmul.f32 %v239, %v295
    %v304 = vmul.f32 %v240, %v296
    %v305 = vmul.f32 %v241, %v297
    %v306 = vmul.f32 %v242, %v298
    %v307 = vmul.f32 %v243, %v299
    %v308 = vmul.f32 %v244, %v300
    %v309 = vmul.f32 %v245, %v301
    %v310 = vpack.c.bf16 %v303, %v302
    %v311 = vpack.c.bf16 %v305, %v304
    %v312 = vpack.c.bf16 %v307, %v306
    %v313 = vpack.c.bf16 %v309, %v308
    %v314 = vld [vmem:[%s5] sm:$0xff]
    %v315 = vpack.c.bf16 %v314, %v314
    %v316 = vld [vmem:[%s6] sm:$0xff]
    %318 = vset.pattern.permute.xlu0 0
    %319 = vperm.xlu0 %318, %v316
    %v320 = vpop.permute.xlu0 %319
    %v323 = vsel %vm50, %v315, 0
    %325 = vmatprep.subr.bf16.mxu0 0
    %326 = vmatpush1.bf16.msra.mxu0 %v310
    %327 = vmatprep.subr.bf16.mxu0 0
    %328 = vmatpush1.bf16.msra.mxu0 %v311
    %329 = vmatprep.subr.bf16.mxu0 0
    %330 = vmatpush1.bf16.msra.mxu0 0
    %331 = vmatprep.subr.bf16.mxu0 0
    %332 = vmatpush1.bf16.msra.mxu0 0
    %333 = vmatprep.subr.bf16.mxu0 0
    %334 = vmatpush1.bf16.msra.mxu0 0
    %335 = vmatprep.subr.bf16.mxu0 0
    %336 = vmatpush1.bf16.msra.mxu0 0
    %337 = vmatprep.subr.bf16.mxu0 0
    %338 = vmatpush1.bf16.msra.mxu0 0
    %339 = vmatprep.subr.bf16.mxu0 0
    %340 = vmatpush1.bf16.msra.mxu0 0
    %341 = vmatprep.subr.bf16.mxu0 0
    %342 = vmatpush1.bf16.msra.mxu0 0
    %343 = vmatprep.subr.bf16.mxu0 0
    %344 = vmatpush1.bf16.msra.mxu0 0
    %345 = vmatprep.subr.bf16.mxu0 0
    %346 = vmatpush1.bf16.msra.mxu0 0
    %347 = vmatprep.subr.bf16.mxu0 0
    %348 = vmatpush1.bf16.msra.mxu0 0
    %349 = vmatprep.subr.bf16.mxu0 0
    %350 = vmatpush1.bf16.msra.mxu0 0
    %351 = vmatprep.subr.bf16.mxu0 0
    %352 = vmatpush1.bf16.msra.mxu0 0
    %353 = vmatprep.subr.bf16.mxu0 0
    %354 = vmatpush1.bf16.msra.mxu0 0
    %355 = vmatprep.subr.bf16.mxu0 0
    %356 = vmatpush1.bf16.msra.mxu0 0
    %357 = vmatprep.mubr.bf16.mxu0 0
    %358 = vmatmul.mubr.bf16.gmra.mrb[0].mxu0 %v323
    %v359 = vpop.f32.mrb[0].mxu0
    %v360 = vadd.f32 %v320, %v359
    %v361 = vpop.f32.mrb[0].mxu0
    %v362 = vpop.f32.mrb[0].mxu0
    %v363 = vpop.f32.mrb[0].mxu0
    %364 = vdwg.mxu0
    %365 = vmatprep.subr.bf16.mxu0 0
    %366 = vmatpush1.bf16.msra.mxu0 %v312
    %367 = vmatprep.subr.bf16.mxu0 0
    %368 = vmatpush1.bf16.msra.mxu0 %v313
    %369 = vmatprep.subr.bf16.mxu0 0
    %370 = vmatpush1.bf16.msra.mxu0 0
    %371 = vmatprep.subr.bf16.mxu0 0
    %372 = vmatpush1.bf16.msra.mxu0 0
    %373 = vmatprep.subr.bf16.mxu0 0
    %374 = vmatpush1.bf16.msra.mxu0 0
    %375 = vmatprep.subr.bf16.mxu0 0
    %376 = vmatpush1.bf16.msra.mxu0 0
    %377 = vmatprep.subr.bf16.mxu0 0
    %378 = vmatpush1.bf16.msra.mxu0 0
    %379 = vmatprep.subr.bf16.mxu0 0
    %380 = vmatpush1.bf16.msra.mxu0 0
    %381 = vmatprep.subr.bf16.mxu0 0
    %382 = vmatpush1.bf16.msra.mxu0 0
    %383 = vmatprep.subr.bf16.mxu0 0
    %384 = vmatpush1.bf16.msra.mxu0 0
    %385 = vmatprep.subr.bf16.mxu0 0
    %386 = vmatpush1.bf16.msra.mxu0 0
    %387 = vmatprep.subr.bf16.mxu0 0
    %388 = vmatpush1.bf16.msra.mxu0 0
    %389 = vmatprep.subr.bf16.mxu0 0
    %390 = vmatpush1.bf16.msra.mxu0 0
    %391 = vmatprep.subr.bf16.mxu0 0
    %392 = vmatpush1.bf16.msra.mxu0 0
    %393 = vmatprep.subr.bf16.mxu0 0
    %394 = vmatpush1.bf16.msra.mxu0 0
    %395 = vmatprep.subr.bf16.mxu0 0
    %396 = vmatpush1.bf16.msra.mxu0 0
    %397 = vmatprep.mubr.bf16.mxu0 0
    %398 = vmatmul.mubr.bf16.gmra.mrb[0].mxu0 %v323
    %v399 = vpop.f32.mrb[0].mxu0
    %v400 = vadd.f32 %v320, %v399
    %v401 = vpop.f32.mrb[0].mxu0
    %v402 = vpop.f32.mrb[0].mxu0
    %v403 = vpop.f32.mrb[0].mxu0
    %404 = vdwg.mxu0
    %v405 = vadd.f32 %v46, %v360
    %v406 = vadd.f32 %v47, %v400
    %s407 = scalar_lea.vmem %s1, 1
    %v408 = vld [vmem:[%s407] sm:$0x1]
    %s409 = scalar_lea.vmem %s2, 1
    %v410 = vld [vmem:[%s409] sm:$0x1]
    %v411 = vsel %vm50, %v405, 0.0
    %412 = vadd.xlane.f32.xlu0 %v411
    %v413 = vpop.xlane.xlu0 %412
    %v414 = vsel %vm50, %v406, 0.0
    %415 = vadd.xlane.f32.xlu0 %v414
    %v416 = vpop.xlane.xlu0 %415
    %v417 = vmul.f32 %v413, %v57
    %v418 = vmul.f32 %v416, %v57
    %v419 = vsub.f32 %v405, %v417
    %v420 = vsub.f32 %v406, %v418
    %v421 = vmul.f32 %v419, %v419
    %v422 = vmul.f32 %v420, %v420
    %v423 = vsel %vm50, %v421, 0.0
    %424 = vadd.xlane.f32.xlu0 %v423
    %v425 = vpop.xlane.xlu0 %424
    %v426 = vsel %vm50, %v422, 0.0
    %427 = vadd.xlane.f32.xlu0 %v426
    %v428 = vpop.xlane.xlu0 %427
    %v429 = vmul.f32 %v425, %v57
    %v430 = vmul.f32 %v428, %v57
    %v431 = vadd.f32 %v429, 1e-05
    %v432 = vadd.f32 %v430, 1e-05
    %v433 = vrsqrt.pop %v431
    %v434 = vrsqrt.pop %v432
    %v435 = vmul.f32 %v419, %v433
    %v436 = vmul.f32 %v420, %v434
    %v438 = vlaneseq
    %v439 = vshrl.u32 %v438, 7
    %v440 = vsub.s32 0, %v439
    %v441 = vrot.slane %v408, %v440
    %v443 = vmul.f32 %v435, %v441
    %v444 = vmul.f32 %v436, %v441
    %v446 = vlaneseq
    %v447 = vshrl.u32 %v446, 7
    %v448 = vsub.s32 0, %v447
    %v449 = vrot.slane %v410, %v448
    %v451 = vadd.f32 %v443, %v449
    %v452 = vadd.f32 %v444, %v449
    %v453 = vpack.c.bf16 %v452, %v451
    %v454 = vld [vmem:[%s7] sm:$0xff]
    %v455 = vld [vmem:[%s7 + $0x8] sm:$0xff]
    %v456 = vld [vmem:[%s7 + $0x10] sm:$0xff]
    %v457 = vld [vmem:[%s7 + $0x18] sm:$0xff]
    %v458 = vpack.c.bf16 %v455, %v454
    %v459 = vpack.c.bf16 %v457, %v456
    %v460 = vld [vmem:[%s8] sm:$0x1]
    %v462 = vlaneseq
    %v463 = vshrl.u32 %v462, 7
    %v464 = vsub.s32 0, %v463
    %v465 = vrot.slane %v460, %v464
    %v468 = vsel %vm50, %v453, 0
    %470 = vmatprep.subr.bf16.mxu0 0
    %471 = vmatpush1.bf16.msra.mxu0 %v458
    %472 = vmatprep.subr.bf16.mxu0 0
    %473 = vmatpush1.bf16.msra.mxu0 %v459
    %474 = vmatprep.subr.bf16.mxu0 0
    %475 = vmatpush1.bf16.msra.mxu0 0
    %476 = vmatprep.subr.bf16.mxu0 0
    %477 = vmatpush1.bf16.msra.mxu0 0
    %478 = vmatprep.subr.bf16.mxu0 0
    %479 = vmatpush1.bf16.msra.mxu0 0
    %480 = vmatprep.subr.bf16.mxu0 0
    %481 = vmatpush1.bf16.msra.mxu0 0
    %482 = vmatprep.subr.bf16.mxu0 0
    %483 = vmatpush1.bf16.msra.mxu0 0
    %484 = vmatprep.subr.bf16.mxu0 0
    %485 = vmatpush1.bf16.msra.mxu0 0
    %486 = vmatprep.subr.bf16.mxu0 0
    %487 = vmatpush1.bf16.msra.mxu0 0
    %488 = vmatprep.subr.bf16.mxu0 0
    %489 = vmatpush1.bf16.msra.mxu0 0
    %490 = vmatprep.subr.bf16.mxu0 0
    %491 = vmatpush1.bf16.msra.mxu0 0
    %492 = vmatprep.subr.bf16.mxu0 0
    %493 = vmatpush1.bf16.msra.mxu0 0
    %494 = vmatprep.subr.bf16.mxu0 0
    %495 = vmatpush1.bf16.msra.mxu0 0
    %496 = vmatprep.subr.bf16.mxu0 0
    %497 = vmatpush1.bf16.msra.mxu0 0
    %498 = vmatprep.subr.bf16.mxu0 0
    %499 = vmatpush1.bf16.msra.mxu0 0
    %500 = vmatprep.subr.bf16.mxu0 0
    %501 = vmatpush1.bf16.msra.mxu0 0
    %502 = vmatprep.mubr.bf16.mxu0 0
    %503 = vmatmul.mubr.bf16.gmra.mrb[0].mxu0 %v468
    %v504 = vpop.f32.mrb[0].mxu0
    %v505 = vadd.f32 %v465, %v504
    %v506 = vpop.f32.mrb[0].mxu0
    %v507 = vpop.f32.mrb[0].mxu0
    %v508 = vadd.f32 %v465, %v507
    %v509 = vpop.f32.mrb[0].mxu0
    %510 = vdwg.mxu0
    %v511 = vmul.f32 %v505, 0.5
    %v512 = vmul.f32 %v508, 0.5
    %v513 = vmul.f32 %v505, 0.044715
    %v514 = vmul.f32 %v508, 0.044715
    %v515 = vmul.f32 %v513, %v505
    %v516 = vmul.f32 %v514, %v508
    %v517 = vmul.f32 %v515, %v505
    %v518 = vmul.f32 %v516, %v508
    %v519 = vadd.f32 %v505, %v517
    %v520 = vadd.f32 %v508, %v518
    %v521 = vmul.f32 %v519, 0.7978846
    %v522 = vmul.f32 %v520, 0.7978846
    %v523 = vtanh.pop %v521
    %v524 = vtanh.pop %v522
    %v525 = vadd.f32 %v523, 1.0
    %v526 = vadd.f32 %v524, 1.0
    %v527 = vmul.f32 %v511, %v525
    %v528 = vmul.f32 %v512, %v526
    %v529 = vpack.c.bf16 %v528, %v527
    %v530 = vld [vmem:[%s9] sm:$0xff]
    %v531 = vld [vmem:[%s9 + $0x8] sm:$0xff]
    %v532 = vpack.c.bf16 %v531, %v530
    %v533 = vld [vmem:[%s10] sm:$0x1]
    %v535 = vlaneseq
    %v536 = vshrl.u32 %v535, 7
    %v537 = vsub.s32 0, %v536
    %v538 = vrot.slane %v533, %v537
    %vm540 = vcmask 130048
    %v542 = vsel %vm540, %v529, 0
    %544 = vmatprep.subr.bf16.mxu0 0
    %545 = vmatpush1.bf16.msra.mxu0 %v532
    %546 = vmatprep.subr.bf16.mxu0 0
    %547 = vmatpush1.bf16.msra.mxu0 0
    %548 = vmatprep.subr.bf16.mxu0 0
    %549 = vmatpush1.bf16.msra.mxu0 0
    %550 = vmatprep.subr.bf16.mxu0 0
    %551 = vmatpush1.bf16.msra.mxu0 0
    %552 = vmatprep.subr.bf16.mxu0 0
    %553 = vmatpush1.bf16.msra.mxu0 0
    %554 = vmatprep.subr.bf16.mxu0 0
    %555 = vmatpush1.bf16.msra.mxu0 0
    %556 = vmatprep.subr.bf16.mxu0 0
    %557 = vmatpush1.bf16.msra.mxu0 0
    %558 = vmatprep.subr.bf16.mxu0 0
    %559 = vmatpush1.bf16.msra.mxu0 0
    %560 = vmatprep.subr.bf16.mxu0 0
    %561 = vmatpush1.bf16.msra.mxu0 0
    %562 = vmatprep.subr.bf16.mxu0 0
    %563 = vmatpush1.bf16.msra.mxu0 0
    %564 = vmatprep.subr.bf16.mxu0 0
    %565 = vmatpush1.bf16.msra.mxu0 0
    %566 = vmatprep.subr.bf16.mxu0 0
    %567 = vmatpush1.bf16.msra.mxu0 0
    %568 = vmatprep.subr.bf16.mxu0 0
    %569 = vmatpush1.bf16.msra.mxu0 0
    %570 = vmatprep.subr.bf16.mxu0 0
    %571 = vmatpush1.bf16.msra.mxu0 0
    %572 = vmatprep.subr.bf16.mxu0 0
    %573 = vmatpush1.bf16.msra.mxu0 0
    %574 = vmatprep.subr.bf16.mxu0 0
    %575 = vmatpush1.bf16.msra.mxu0 0
    %576 = vmatprep.mubr.bf16.mxu0 0
    %577 = vmatmul.mubr.bf16.gmra.mrb[0].mxu0 %v542
    %v578 = vpop.f32.mrb[0].mxu0
    %v579 = vadd.f32 %v538, %v578
    %v580 = vpop.f32.mrb[0].mxu0
    %v581 = vpop.f32.mrb[0].mxu0
    %v582 = vadd.f32 %v538, %v581
    %v583 = vpop.f32.mrb[0].mxu0
    %584 = vdwg.mxu0
    %v585 = vadd.f32 %v405, %v579
    %v586 = vadd.f32 %v406, %v582
    %s587 = scalar_lea.vmem %s1, 2
    %v588 = vld [vmem:[%s587] sm:$0x1]
    %s589 = scalar_lea.vmem %s2, 2
    %v590 = vld [vmem:[%s589] sm:$0x1]
    %v591 = vsel %vm50, %v585, 0.0
    %592 = vadd.xlane.f32.xlu0 %v591
    %v593 = vpop.xlane.xlu0 %592
    %v594 = vsel %vm50, %v586, 0.0
    %595 = vadd.xlane.f32.xlu0 %v594
    %v596 = vpop.xlane.xlu0 %595
    %v597 = vmul.f32 %v593, %v57
    %v598 = vmul.f32 %v596, %v57
    %v599 = vsub.f32 %v585, %v597
    %v600 = vsub.f32 %v586, %v598
    %v601 = vmul.f32 %v599, %v599
    %v602 = vmul.f32 %v600, %v600
    %v603 = vsel %vm50, %v601, 0.0
    %604 = vadd.xlane.f32.xlu0 %v603
    %v605 = vpop.xlane.xlu0 %604
    %v606 = vsel %vm50, %v602, 0.0
    %607 = vadd.xlane.f32.xlu0 %v606
    %v608 = vpop.xlane.xlu0 %607
    %v609 = vmul.f32 %v605, %v57
    %v610 = vmul.f32 %v608, %v57
    %v611 = vadd.f32 %v609, 1e-05
    %v612 = vadd.f32 %v610, 1e-05
    %v613 = vrsqrt.pop %v611
    %v614 = vrsqrt.pop %v612
    %v615 = vmul.f32 %v599, %v613
    %v616 = vmul.f32 %v600, %v614
    %v618 = vlaneseq
    %v619 = vshrl.u32 %v618, 7
    %v620 = vsub.s32 0, %v619
    %v621 = vrot.slane %v588, %v620
    %v623 = vmul.f32 %v615, %v621
    %v624 = vmul.f32 %v616, %v621
    %v626 = vlaneseq
    %v627 = vshrl.u32 %v626, 7
    %v628 = vsub.s32 0, %v627
    %v629 = vrot.slane %v590, %v628
    %v631 = vadd.f32 %v623, %v629
    %v632 = vadd.f32 %v624, %v629
    %v633 = vpack.c.bf16 %v631, %v631
    %v634 = vpack.c.bf16 %v632, %v632
    %s635 = scalar_lea.vmem %s3, 32
    %v636 = vld [vmem:[%s635] sm:$0xff]
    %v637 = vld [vmem:[%s635 + $0x8] sm:$0xff]
    %v638 = vld [vmem:[%s635 + $0x10] sm:$0xff]
    %v639 = vld [vmem:[%s635 + $0x18] sm:$0xff]
    %v640 = vpack.c.bf16 %v637, %v636
    %v641 = vpack.c.bf16 %v639, %v638
    %s642 = scalar_lea.vmem %s4, 32
    %v643 = vld [vmem:[%s642] sm:$0xff]
    %v644 = vld [vmem:[%s642 + $0x8] sm:$0xff]
    %v645 = vld [vmem:[%s642 + $0x10] sm:$0xff]
    %v646 = vld [vmem:[%s642 + $0x18] sm:$0xff]
    %648 = vset.pattern.permute.xlu0 0
    %649 = vperm.xlu0 %648, %v643
    %v650 = vpop.permute.xlu0 %649
    %653 = vset.pattern.permute.xlu0 0
    %654 = vperm.xlu0 %653, %v644
    %v655 = vpop.permute.xlu0 %654
    %658 = vset.pattern.permute.xlu0 0
    %659 = vperm.xlu0 %658, %v645
    %v660 = vpop.permute.xlu0 %659
    %663 = vset.pattern.permute.xlu0 0
    %664 = vperm.xlu0 %663, %v646
    %v665 = vpop.permute.xlu0 %664
    %v668 = vsel %vm126, %v640, 0
    %v671 = vsel %vm126, %v641, 0
    %v674 = vsel %vm133, %v633, 0
    %676 = vmatprep.subr.bf16.mxu0 0
    %677 = vmatpush1.bf16.msra.mxu0 %v674
    %678 = vmatprep.subr.bf16.mxu0 0
    %679 = vmatpush1.bf16.msra.mxu0 0
    %680 = vmatprep.subr.bf16.mxu0 0
    %681 = vmatpush1.bf16.msra.mxu0 0
    %682 = vmatprep.subr.bf16.mxu0 0
    %683 = vmatpush1.bf16.msra.mxu0 0
    %684 = vmatprep.subr.bf16.mxu0 0
    %685 = vmatpush1.bf16.msra.mxu0 0
    %686 = vmatprep.subr.bf16.mxu0 0
    %687 = vmatpush1.bf16.msra.mxu0 0
    %688 = vmatprep.subr.bf16.mxu0 0
    %689 = vmatpush1.bf16.msra.mxu0 0
    %690 = vmatprep.subr.bf16.mxu0 0
    %691 = vmatpush1.bf16.msra.mxu0 0
    %692 = vmatprep.subr.bf16.mxu0 0
    %693 = vmatpush1.bf16.msra.mxu0 0
    %694 = vmatprep.subr.bf16.mxu0 0
    %695 = vmatpush1.bf16.msra.mxu0 0
    %696 = vmatprep.subr.bf16.mxu0 0
    %697 = vmatpush1.bf16.msra.mxu0 0
    %698 = vmatprep.subr.bf16.mxu0 0
    %699 = vmatpush1.bf16.msra.mxu0 0
    %700 = vmatprep.subr.bf16.mxu0 0
    %701 = vmatpush1.bf16.msra.mxu0 0
    %702 = vmatprep.subr.bf16.mxu0 0
    %703 = vmatpush1.bf16.msra.mxu0 0
    %704 = vmatprep.subr.bf16.mxu0 0
    %705 = vmatpush1.bf16.msra.mxu0 0
    %706 = vmatprep.subr.bf16.mxu0 0
    %707 = vmatpush1.bf16.msra.mxu0 0
    %708 = vmatprep.mubr.bf16.mxu0 0
    %709 = vmatmul.mubr.bf16.gmra.mrb[0].mxu0 %v668
    %v710 = vpop.f32.mrb[0].mxu0
    %v711 = vadd.f32 %v650, %v710
    %v712 = vpop.f32.mrb[0].mxu0
    %v713 = vpop.f32.mrb[0].mxu0
    %v714 = vadd.f32 %v655, %v713
    %v715 = vpop.f32.mrb[0].mxu0
    %716 = vmatprep.mubr.bf16.mxu0 0
    %717 = vmatmul.mubr.bf16.gmra.mrb[0].mxu0 %v671
    %v718 = vpop.f32.mrb[0].mxu0
    %v719 = vadd.f32 %v660, %v718
    %v720 = vpop.f32.mrb[0].mxu0
    %v721 = vpop.f32.mrb[0].mxu0
    %v722 = vadd.f32 %v665, %v721
    %v723 = vpop.f32.mrb[0].mxu0
    %724 = vdwg.mxu0
    %v726 = vsel %vm133, %v634, 0
    %728 = vmatprep.subr.bf16.mxu0 0
    %729 = vmatpush1.bf16.msra.mxu0 %v726
    %730 = vmatprep.subr.bf16.mxu0 0
    %731 = vmatpush1.bf16.msra.mxu0 0
    %732 = vmatprep.subr.bf16.mxu0 0
    %733 = vmatpush1.bf16.msra.mxu0 0
    %734 = vmatprep.subr.bf16.mxu0 0
    %735 = vmatpush1.bf16.msra.mxu0 0
    %736 = vmatprep.subr.bf16.mxu0 0
    %737 = vmatpush1.bf16.msra.mxu0 0
    %738 = vmatprep.subr.bf16.mxu0 0
    %739 = vmatpush1.bf16.msra.mxu0 0
    %740 = vmatprep.subr.bf16.mxu0 0
    %741 = vmatpush1.bf16.msra.mxu0 0
    %742 = vmatprep.subr.bf16.mxu0 0
    %743 = vmatpush1.bf16.msra.mxu0 0
    %744 = vmatprep.subr.bf16.mxu0 0
    %745 = vmatpush1.bf16.msra.mxu0 0
    %746 = vmatprep.subr.bf16.mxu0 0
    %747 = vmatpush1.bf16.msra.mxu0 0
    %748 = vmatprep.subr.bf16.mxu0 0
    %749 = vmatpush1.bf16.msra.mxu0 0
    %750 = vmatprep.subr.bf16.mxu0 0
    %751 = vmatpush1.bf16.msra.mxu0 0
    %752 = vmatprep.subr.bf16.mxu0 0
    %753 = vmatpush1.bf16.msra.mxu0 0
    %754 = vmatprep.subr.bf16.mxu0 0
    %755 = vmatpush1.bf16.msra.mxu0 0
    %756 = vmatprep.subr.bf16.mxu0 0
    %757 = vmatpush1.bf16.msra.mxu0 0
    %758 = vmatprep.subr.bf16.mxu0 0
    %759 = vmatpush1.bf16.msra.mxu0 0
    %760 = vmatprep.mubr.bf16.mxu0 0
    %761 = vmatmul.mubr.bf16.gmra.mrb[0].mxu0 %v668
    %v762 = vpop.f32.mrb[0].mxu0
    %v763 = vadd.f32 %v650, %v762
    %v764 = vpop.f32.mrb[0].mxu0
    %v765 = vpop.f32.mrb[0].mxu0
    %v766 = vadd.f32 %v655, %v765
    %v767 = vpop.f32.mrb[0].mxu0
    %768 = vmatprep.mubr.bf16.mxu0 0
    %769 = vmatmul.mubr.bf16.gmra.mrb[0].mxu0 %v671
    %v770 = vpop.f32.mrb[0].mxu0
    %v771 = vadd.f32 %v660, %v770
    %v772 = vpop.f32.mrb[0].mxu0
    %v773 = vpop.f32.mrb[0].mxu0
    %v774 = vadd.f32 %v665, %v773
    %v775 = vpop.f32.mrb[0].mxu0
    %776 = vdwg.mxu0
    %v777 = vmul.f32 %v711, 0.5
    %v778 = vmul.f32 %v714, 0.5
    %v779 = vmul.f32 %v719, 0.5
    %v780 = vmul.f32 %v722, 0.5
    %v781 = vmul.f32 %v763, 0.5
    %v782 = vmul.f32 %v766, 0.5
    %v783 = vmul.f32 %v771, 0.5
    %v784 = vmul.f32 %v774, 0.5
    %v785 = vmul.f32 %v711, 0.044715
    %v786 = vmul.f32 %v714, 0.044715
    %v787 = vmul.f32 %v719, 0.044715
    %v788 = vmul.f32 %v722, 0.044715
    %v789 = vmul.f32 %v763, 0.044715
    %v790 = vmul.f32 %v766, 0.044715
    %v791 = vmul.f32 %v771, 0.044715
    %v792 = vmul.f32 %v774, 0.044715
    %v793 = vmul.f32 %v785, %v711
    %v794 = vmul.f32 %v786, %v714
    %v795 = vmul.f32 %v787, %v719
    %v796 = vmul.f32 %v788, %v722
    %v797 = vmul.f32 %v789, %v763
    %v798 = vmul.f32 %v790, %v766
    %v799 = vmul.f32 %v791, %v771
    %v800 = vmul.f32 %v792, %v774
    %v801 = vmul.f32 %v793, %v711
    %v802 = vmul.f32 %v794, %v714
    %v803 = vmul.f32 %v795, %v719
    %v804 = vmul.f32 %v796, %v722
    %v805 = vmul.f32 %v797, %v763
    %v806 = vmul.f32 %v798, %v766
    %v807 = vmul.f32 %v799, %v771
    %v808 = vmul.f32 %v800, %v774
    %v809 = vadd.f32 %v711, %v801
    %v810 = vadd.f32 %v714, %v802
    %v811 = vadd.f32 %v719, %v803
    %v812 = vadd.f32 %v722, %v804
    %v813 = vadd.f32 %v763, %v805
    %v814 = vadd.f32 %v766, %v806
    %v815 = vadd.f32 %v771, %v807
    %v816 = vadd.f32 %v774, %v808
    %v817 = vmul.f32 %v809, 0.7978846
    %v818 = vmul.f32 %v810, 0.7978846
    %v819 = vmul.f32 %v811, 0.7978846
    %v820 = vmul.f32 %v812, 0.7978846
    %v821 = vmul.f32 %v813, 0.7978846
    %v822 = vmul.f32 %v814, 0.7978846
    %v823 = vmul.f32 %v815, 0.7978846
    %v824 = vmul.f32 %v816, 0.7978846
    %v825 = vtanh.pop %v817
    %v826 = vtanh.pop %v818
    %v827 = vtanh.pop %v819
    %v828 = vtanh.pop %v820
    %v829 = vtanh.pop %v821
    %v830 = vtanh.pop %v822
    %v831 = vtanh.pop %v823
    %v832 = vtanh.pop %v824
    %v833 = vadd.f32 %v825, 1.0
    %v834 = vadd.f32 %v826, 1.0
    %v835 = vadd.f32 %v827, 1.0
    %v836 = vadd.f32 %v828, 1.0
    %v837 = vadd.f32 %v829, 1.0
    %v838 = vadd.f32 %v830, 1.0
    %v839 = vadd.f32 %v831, 1.0
    %v840 = vadd.f32 %v832, 1.0
    %v841 = vmul.f32 %v777, %v833
    %v842 = vmul.f32 %v778, %v834
    %v843 = vmul.f32 %v779, %v835
    %v844 = vmul.f32 %v780, %v836
    %v845 = vmul.f32 %v781, %v837
    %v846 = vmul.f32 %v782, %v838
    %v847 = vmul.f32 %v783, %v839
    %v848 = vmul.f32 %v784, %v840
    %v849 = vpack.c.bf16 %v842, %v841
    %v850 = vpack.c.bf16 %v844, %v843
    %v851 = vpack.c.bf16 %v846, %v845
    %v852 = vpack.c.bf16 %v848, %v847
    %s853 = scalar_lea.vmem %s5, 8
    %v854 = vld [vmem:[%s853] sm:$0xff]
    %v855 = vpack.c.bf16 %v854, %v854
    %s856 = scalar_lea.vmem %s6, 8
    %v857 = vld [vmem:[%s856] sm:$0xff]
    %859 = vset.pattern.permute.xlu0 0
    %860 = vperm.xlu0 %859, %v857
    %v861 = vpop.permute.xlu0 %860
    %v864 = vsel %vm50, %v855, 0
    %866 = vmatprep.subr.bf16.mxu0 0
    %867 = vmatpush1.bf16.msra.mxu0 %v849
    %868 = vmatprep.subr.bf16.mxu0 0
    %869 = vmatpush1.bf16.msra.mxu0 %v850
    %870 = vmatprep.subr.bf16.mxu0 0
    %871 = vmatpush1.bf16.msra.mxu0 0
    %872 = vmatprep.subr.bf16.mxu0 0
    %873 = vmatpush1.bf16.msra.mxu0 0
    %874 = vmatprep.subr.bf16.mxu0 0
    %875 = vmatpush1.bf16.msra.mxu0 0
    %876 = vmatprep.subr.bf16.mxu0 0
    %877 = vmatpush1.bf16.msra.mxu0 0
    %878 = vmatprep.subr.bf16.mxu0 0
    %879 = vmatpush1.bf16.msra.mxu0 0
    %880 = vmatprep.subr.bf16.mxu0 0
    %881 = vmatpush1.bf16.msra.mxu0 0
    %882 = vmatprep.subr.bf16.mxu0 0
    %883 = vmatpush1.bf16.msra.mxu0 0
    %884 = vmatprep.subr.bf16.mxu0 0
    %885 = vmatpush1.bf16.msra.mxu0 0
    %886 = vmatprep.subr.bf16.mxu0 0
    %887 = vmatpush1.bf16.msra.mxu0 0
    %888 = vmatprep.subr.bf16.mxu0 0
    %889 = vmatpush1.bf16.msra.mxu0 0
    %890 = vmatprep.subr.bf16.mxu0 0
    %891 = vmatpush1.bf16.msra.mxu0 0
    %892 = vmatprep.subr.bf16.mxu0 0
    %893 = vmatpush1.bf16.msra.mxu0 0
    %894 = vmatprep.subr.bf16.mxu0 0
    %895 = vmatpush1.bf16.msra.mxu0 0
    %896 = vmatprep.subr.bf16.mxu0 0
    %897 = vmatpush1.bf16.msra.mxu0 0
    %898 = vmatprep.mubr.bf16.mxu0 0
    %899 = vmatmul.mubr.bf16.gmra.mrb[0].mxu0 %v864
    %v900 = vpop.f32.mrb[0].mxu0
    %v901 = vadd.f32 %v861, %v900
    %v902 = vpop.f32.mrb[0].mxu0
    %v903 = vpop.f32.mrb[0].mxu0
    %v904 = vpop.f32.mrb[0].mxu0
    %905 = vdwg.mxu0
    %906 = vmatprep.subr.bf16.mxu0 0
    %907 = vmatpush1.bf16.msra.mxu0 %v851
    %908 = vmatprep.subr.bf16.mxu0 0
    %909 = vmatpush1.bf16.msra.mxu0 %v852
    %910 = vmatprep.subr.bf16.mxu0 0
    %911 = vmatpush1.bf16.msra.mxu0 0
    %912 = vmatprep.subr.bf16.mxu0 0
    %913 = vmatpush1.bf16.msra.mxu0 0
    %914 = vmatprep.subr.bf16.mxu0 0
    %915 = vmatpush1.bf16.msra.mxu0 0
    %916 = vmatprep.subr.bf16.mxu0 0
    %917 = vmatpush1.bf16.msra.mxu0 0
    %918 = vmatprep.subr.bf16.mxu0 0
    %919 = vmatpush1.bf16.msra.mxu0 0
    %920 = vmatprep.subr.bf16.mxu0 0
    %921 = vmatpush1.bf16.msra.mxu0 0
    %922 = vmatprep.subr.bf16.mxu0 0
    %923 = vmatpush1.bf16.msra.mxu0 0
    %924 = vmatprep.subr.bf16.mxu0 0
    %925 = vmatpush1.bf16.msra.mxu0 0
    %926 = vmatprep.subr.bf16.mxu0 0
    %927 = vmatpush1.bf16.msra.mxu0 0
    %928 = vmatprep.subr.bf16.mxu0 0
    %929 = vmatpush1.bf16.msra.mxu0 0
    %930 = vmatprep.subr.bf16.mxu0 0
    %931 = vmatpush1.bf16.msra.mxu0 0
    %932 = vmatprep.subr.bf16.mxu0 0
    %933 = vmatpush1.bf16.msra.mxu0 0
    %934 = vmatprep.subr.bf16.mxu0 0
    %935 = vmatpush1.bf16.msra.mxu0 0
    %936 = vmatprep.subr.bf16.mxu0 0
    %937 = vmatpush1.bf16.msra.mxu0 0
    %938 = vmatprep.mubr.bf16.mxu0 0
    %939 = vmatmul.mubr.bf16.gmra.mrb[0].mxu0 %v864
    %v940 = vpop.f32.mrb[0].mxu0
    %v941 = vadd.f32 %v861, %v940
    %v942 = vpop.f32.mrb[0].mxu0
    %v943 = vpop.f32.mrb[0].mxu0
    %v944 = vpop.f32.mrb[0].mxu0
    %945 = vdwg.mxu0
    %v946 = vadd.f32 %v585, %v901
    %v947 = vadd.f32 %v586, %v941
    %s948 = scalar_lea.vmem %s1, 3
    %v949 = vld [vmem:[%s948] sm:$0x1]
    %s950 = scalar_lea.vmem %s2, 3
    %v951 = vld [vmem:[%s950] sm:$0x1]
    %v952 = vsel %vm50, %v946, 0.0
    %953 = vadd.xlane.f32.xlu0 %v952
    %v954 = vpop.xlane.xlu0 %953
    %v955 = vsel %vm50, %v947, 0.0
    %956 = vadd.xlane.f32.xlu0 %v955
    %v957 = vpop.xlane.xlu0 %956
    %v958 = vmul.f32 %v954, %v57
    %v959 = vmul.f32 %v957, %v57
    %v960 = vsub.f32 %v946, %v958
    %v961 = vsub.f32 %v947, %v959
    %v962 = vmul.f32 %v960, %v960
    %v963 = vmul.f32 %v961, %v961
    %v964 = vsel %vm50, %v962, 0.0
    %965 = vadd.xlane.f32.xlu0 %v964
    %v966 = vpop.xlane.xlu0 %965
    %v967 = vsel %vm50, %v963, 0.0
    %968 = vadd.xlane.f32.xlu0 %v967
    %v969 = vpop.xlane.xlu0 %968
    %v970 = vmul.f32 %v966, %v57
    %v971 = vmul.f32 %v969, %v57
    %v972 = vadd.f32 %v970, 1e-05
    %v973 = vadd.f32 %v971, 1e-05
    %v974 = vrsqrt.pop %v972
    %v975 = vrsqrt.pop %v973
    %v976 = vmul.f32 %v960, %v974
    %v977 = vmul.f32 %v961, %v975
    %v979 = vlaneseq
    %v980 = vshrl.u32 %v979, 7
    %v981 = vsub.s32 0, %v980
    %v982 = vrot.slane %v949, %v981
    %v984 = vmul.f32 %v976, %v982
    %v985 = vmul.f32 %v977, %v982
    %v987 = vlaneseq
    %v988 = vshrl.u32 %v987, 7
    %v989 = vsub.s32 0, %v988
    %v990 = vrot.slane %v951, %v989
    %v992 = vadd.f32 %v984, %v990
    %v993 = vadd.f32 %v985, %v990
    %v994 = vpack.c.bf16 %v993, %v992
    %s995 = scalar_lea.vmem %s7, 32
    %v996 = vld [vmem:[%s995] sm:$0xff]
    %v997 = vld [vmem:[%s995 + $0x8] sm:$0xff]
    %v998 = vld [vmem:[%s995 + $0x10] sm:$0xff]
    %v999 = vld [vmem:[%s995 + $0x18] sm:$0xff]
    %v1000 = vpack.c.bf16 %v997, %v996
    %v1001 = vpack.c.bf16 %v999, %v998
    %s1002 = scalar_lea.vmem %s8, 1
    %v1003 = vld [vmem:[%s1002] sm:$0x1]
    %v1005 = vlaneseq
    %v1006 = vshrl.u32 %v1005, 7
    %v1007 = vsub.s32 0, %v1006
    %v1008 = vrot.slane %v1003, %v1007
    %v1011 = vsel %vm50, %v994, 0
    %1013 = vmatprep.subr.bf16.mxu0 0
    %1014 = vmatpush1.bf16.msra.mxu0 %v1000
    %1015 = vmatprep.subr.bf16.mxu0 0
    %1016 = vmatpush1.bf16.msra.mxu0 %v1001
    %1017 = vmatprep.subr.bf16.mxu0 0
    %1018 = vmatpush1.bf16.msra.mxu0 0
    %1019 = vmatprep.subr.bf16.mxu0 0
    %1020 = vmatpush1.bf16.msra.mxu0 0
    %1021 = vmatprep.subr.bf16.mxu0 0
    %1022 = vmatpush1.bf16.msra.mxu0 0
    %1023 = vmatprep.subr.bf16.mxu0 0
    %1024 = vmatpush1.bf16.msra.mxu0 0
    %1025 = vmatprep.subr.bf16.mxu0 0
    %1026 = vmatpush1.bf16.msra.mxu0 0
    %1027 = vmatprep.subr.bf16.mxu0 0
    %1028 = vmatpush1.bf16.msra.mxu0 0
    %1029 = vmatprep.subr.bf16.mxu0 0
    %1030 = vmatpush1.bf16.msra.mxu0 0
    %1031 = vmatprep.subr.bf16.mxu0 0
    %1032 = vmatpush1.bf16.msra.mxu0 0
    %1033 = vmatprep.subr.bf16.mxu0 0
    %1034 = vmatpush1.bf16.msra.mxu0 0
    %1035 = vmatprep.subr.bf16.mxu0 0
    %1036 = vmatpush1.bf16.msra.mxu0 0
    %1037 = vmatprep.subr.bf16.mxu0 0
    %1038 = vmatpush1.bf16.msra.mxu0 0
    %1039 = vmatprep.subr.bf16.mxu0 0
    %1040 = vmatpush1.bf16.msra.mxu0 0
    %1041 = vmatprep.subr.bf16.mxu0 0
    %1042 = vmatpush1.bf16.msra.mxu0 0
    %1043 = vmatprep.subr.bf16.mxu0 0
    %1044 = vmatpush1.bf16.msra.mxu0 0
    %1045 = vmatprep.mubr.bf16.mxu0 0
    %1046 = vmatmul.mubr.bf16.gmra.mrb[0].mxu0 %v1011
    %v1047 = vpop.f32.mrb[0].mxu0
    %v1048 = vadd.f32 %v1008, %v1047
    %v1049 = vpop.f32.mrb[0].mxu0
    %v1050 = vpop.f32.mrb[0].mxu0
    %v1051 = vadd.f32 %v1008, %v1050
    %v1052 = vpop.f32.mrb[0].mxu0
    %1053 = vdwg.mxu0
    %v1054 = vmul.f32 %v1048, 0.5
    %v1055 = vmul.f32 %v1051, 0.5
    %v1056 = vmul.f32 %v1048, 0.044715
    %v1057 = vmul.f32 %v1051, 0.044715
    %v1058 = vmul.f32 %v1056, %v1048
    %v1059 = vmul.f32 %v1057, %v1051
    %v1060 = vmul.f32 %v1058, %v1048
    %v1061 = vmul.f32 %v1059, %v1051
    %v1062 = vadd.f32 %v1048, %v1060
    %v1063 = vadd.f32 %v1051, %v1061
    %v1064 = vmul.f32 %v1062, 0.7978846
    %v1065 = vmul.f32 %v1063, 0.7978846
    %v1066 = vtanh.pop %v1064
    %v1067 = vtanh.pop %v1065
    %v1068 = vadd.f32 %v1066, 1.0
    %v1069 = vadd.f32 %v1067, 1.0
    %v1070 = vmul.f32 %v1054, %v1068
    %v1071 = vmul.f32 %v1055, %v1069
    %v1072 = vpack.c.bf16 %v1071, %v1070
    %s1073 = scalar_lea.vmem %s9, 16
    %v1074 = vld [vmem:[%s1073] sm:$0xff]
    %v1075 = vld [vmem:[%s1073 + $0x8] sm:$0xff]
    %v1076 = vpack.c.bf16 %v1075, %v1074
    %s1077 = scalar_lea.vmem %s10, 1
    %v1078 = vld [vmem:[%s1077] sm:$0x1]
    %v1080 = vlaneseq
    %v1081 = vshrl.u32 %v1080, 7
    %v1082 = vsub.s32 0, %v1081
    %v1083 = vrot.slane %v1078, %v1082
    %v1086 = vsel %vm540, %v1072, 0
    %1088 = vmatprep.subr.bf16.mxu0 0
    %1089 = vmatpush1.bf16.msra.mxu0 %v1076
    %1090 = vmatprep.subr.bf16.mxu0 0
    %1091 = vmatpush1.bf16.msra.mxu0 0
    %1092 = vmatprep.subr.bf16.mxu0 0
    %1093 = vmatpush1.bf16.msra.mxu0 0
    %1094 = vmatprep.subr.bf16.mxu0 0
    %1095 = vmatpush1.bf16.msra.mxu0 0
    %1096 = vmatprep.subr.bf16.mxu0 0
    %1097 = vmatpush1.bf16.msra.mxu0 0
    %1098 = vmatprep.subr.bf16.mxu0 0
    %1099 = vmatpush1.bf16.msra.mxu0 0
    %1100 = vmatprep.subr.bf16.mxu0 0
    %1101 = vmatpush1.bf16.msra.mxu0 0
    %1102 = vmatprep.subr.bf16.mxu0 0
    %1103 = vmatpush1.bf16.msra.mxu0 0
    %1104 = vmatprep.subr.bf16.mxu0 0
    %1105 = vmatpush1.bf16.msra.mxu0 0
    %1106 = vmatprep.subr.bf16.mxu0 0
    %1107 = vmatpush1.bf16.msra.mxu0 0
    %1108 = vmatprep.subr.bf16.mxu0 0
    %1109 = vmatpush1.bf16.msra.mxu0 0
    %1110 = vmatprep.subr.bf16.mxu0 0
    %1111 = vmatpush1.bf16.msra.mxu0 0
    %1112 = vmatprep.subr.bf16.mxu0 0
    %1113 = vmatpush1.bf16.msra.mxu0 0
    %1114 = vmatprep.subr.bf16.mxu0 0
    %1115 = vmatpush1.bf16.msra.mxu0 0
    %1116 = vmatprep.subr.bf16.mxu0 0
    %1117 = vmatpush1.bf16.msra.mxu0 0
    %1118 = vmatprep.subr.bf16.mxu0 0
    %1119 = vmatpush1.bf16.msra.mxu0 0
    %1120 = vmatprep.mubr.bf16.mxu0 0
    %1121 = vmatmul.mubr.bf16.gmra.mrb[0].mxu0 %v1086
    %v1122 = vpop.f32.mrb[0].mxu0
    %v1123 = vadd.f32 %v1083, %v1122
    %v1124 = vpop.f32.mrb[0].mxu0
    %v1125 = vpop.f32.mrb[0].mxu0
    %v1126 = vadd.f32 %v1083, %v1125
    %v1127 = vpop.f32.mrb[0].mxu0
    %1128 = vdwg.mxu0
    %v1129 = vadd.f32 %v946, %v1123
    %v1130 = vadd.f32 %v947, %v1126
    %s1131 = scalar_lea.vmem %s1, 4
    %v1132 = vld [vmem:[%s1131] sm:$0x1]
    %s1133 = scalar_lea.vmem %s2, 4
    %v1134 = vld [vmem:[%s1133] sm:$0x1]
    %v1135 = vsel %vm50, %v1129, 0.0
    %1136 = vadd.xlane.f32.xlu0 %v1135
    %v1137 = vpop.xlane.xlu0 %1136
    %v1138 = vsel %vm50, %v1130, 0.0
    %1139 = vadd.xlane.f32.xlu0 %v1138
    %v1140 = vpop.xlane.xlu0 %1139
    %v1141 = vmul.f32 %v1137, %v57
    %v1142 = vmul.f32 %v1140, %v57
    %v1143 = vsub.f32 %v1129, %v1141
    %v1144 = vsub.f32 %v1130, %v1142
    %v1145 = vmul.f32 %v1143, %v1143
    %v1146 = vmul.f32 %v1144, %v1144
    %v1147 = vsel %vm50, %v1145, 0.0
    %1148 = vadd.xlane.f32.xlu0 %v1147
    %v1149 = vpop.xlane.xlu0 %1148
    %v1150 = vsel %vm50, %v1146, 0.0
    %1151 = vadd.xlane.f32.xlu0 %v1150
    %v1152 = vpop.xlane.xlu0 %1151
    %v1153 = vmul.f32 %v1149, %v57
    %v1154 = vmul.f32 %v1152, %v57
    %v1155 = vadd.f32 %v1153, 1e-05
    %v1156 = vadd.f32 %v1154, 1e-05
    %v1157 = vrsqrt.pop %v1155
    %v1158 = vrsqrt.pop %v1156
    %v1159 = vmul.f32 %v1143, %v1157
    %v1160 = vmul.f32 %v1144, %v1158
    %v1162 = vlaneseq
    %v1163 = vshrl.u32 %v1162, 7
    %v1164 = vsub.s32 0, %v1163
    %v1165 = vrot.slane %v1132, %v1164
    %v1167 = vmul.f32 %v1159, %v1165
    %v1168 = vmul.f32 %v1160, %v1165
    %v1170 = vlaneseq
    %v1171 = vshrl.u32 %v1170, 7
    %v1172 = vsub.s32 0, %v1171
    %v1173 = vrot.slane %v1134, %v1172
    %v1175 = vadd.f32 %v1167, %v1173
    %v1176 = vadd.f32 %v1168, %v1173
    %v1177 = vsel %vm50, %v1175, 0.0
    %v1178 = vrot.slane %v1177, 4
    %v1179 = vadd.f32 %v1177, %v1178
    %v1180 = vrot.slane %v1179, 2
    %v1181 = vadd.f32 %v1179, %v1180
    %v1182 = vrot.slane %v1181, 1
    %v1183 = vadd.f32 %v1181, %v1182
    %v1184 = vsel %vm50, %v1176, 0.0
    %v1185 = vrot.slane %v1184, 4
    %v1186 = vadd.f32 %v1184, %v1185
    %v1187 = vrot.slane %v1186, 2
    %v1188 = vadd.f32 %v1186, %v1187
    %v1189 = vrot.slane %v1188, 1
    %v1190 = vadd.f32 %v1188, %v1189
    %v1191 = vrcp.pop 8.0
    %v1192 = vmul.f32 %v1183, %v1191
    %v1193 = vmul.f32 %v1190, %v1191
    %v1194 = vpack.c.bf16 %v1192, %v1192
    %v1195 = vpack.c.bf16 %v1193, %v1193
    %v1196 = vld [vmem:[%s11] sm:$0xff]
    %v1197 = vld [vmem:[%s11 + $0x8] sm:$0xff]
    %v1198 = vld [vmem:[%s11 + $0x10] sm:$0xff]
    %v1199 = vld [vmem:[%s11 + $0x18] sm:$0xff]
    %v1200 = vpack.c.bf16 %v1197, %v1196
    %v1201 = vpack.c.bf16 %v1199, %v1198
    %v1202 = vld [vmem:[%s12] sm:$0x1]
    %v1204 = vlaneseq
    %v1205 = vshrl.u32 %v1204, 7
    %v1206 = vsub.s32 0, %v1205
    %v1207 = vrot.slane %v1202, %v1206
    %v1211 = vunpack.c.l.b16 %v1194
    %v1212 = vunpack.c.l.b16 %v1195
    %vm1213 = vcmask 1041409
    %v1214 = vsel %vm1213, %v1212, %v1211
    %v1215 = vpack.c.b16 %v1214, %v1214
    %v1217 = vsel %vm50, %v1215, 0
    %1219 = vmatprep.subr.bf16.mxu0 0
    %1220 = vmatpush1.bf16.msra.mxu0 %v1200
    %1221 = vmatprep.subr.bf16.mxu0 0
    %1222 = vmatpush1.bf16.msra.mxu0 %v1201
    %1223 = vmatprep.subr.bf16.mxu0 0
    %1224 = vmatpush1.bf16.msra.mxu0 0
    %1225 = vmatprep.subr.bf16.mxu0 0
    %1226 = vmatpush1.bf16.msra.mxu0 0
    %1227 = vmatprep.subr.bf16.mxu0 0
    %1228 = vmatpush1.bf16.msra.mxu0 0
    %1229 = vmatprep.subr.bf16.mxu0 0
    %1230 = vmatpush1.bf16.msra.mxu0 0
    %1231 = vmatprep.subr.bf16.mxu0 0
    %1232 = vmatpush1.bf16.msra.mxu0 0
    %1233 = vmatprep.subr.bf16.mxu0 0
    %1234 = vmatpush1.bf16.msra.mxu0 0
    %1235 = vmatprep.subr.bf16.mxu0 0
    %1236 = vmatpush1.bf16.msra.mxu0 0
    %1237 = vmatprep.subr.bf16.mxu0 0
    %1238 = vmatpush1.bf16.msra.mxu0 0
    %1239 = vmatprep.subr.bf16.mxu0 0
    %1240 = vmatpush1.bf16.msra.mxu0 0
    %1241 = vmatprep.subr.bf16.mxu0 0
    %1242 = vmatpush1.bf16.msra.mxu0 0
    %1243 = vmatprep.subr.bf16.mxu0 0
    %1244 = vmatpush1.bf16.msra.mxu0 0
    %1245 = vmatprep.subr.bf16.mxu0 0
    %1246 = vmatpush1.bf16.msra.mxu0 0
    %1247 = vmatprep.subr.bf16.mxu0 0
    %1248 = vmatpush1.bf16.msra.mxu0 0
    %1249 = vmatprep.subr.bf16.mxu0 0
    %1250 = vmatpush1.bf16.msra.mxu0 0
    %1251 = vmatprep.mubr.bf16.mxu0 0
    %1252 = vmatmul.mubr.bf16.gmra.mrb[0].mxu0 %v1217
    %v1253 = vpop.f32.mrb[0].mxu0
    %v1254 = vadd.f32 %v1207, %v1253
    %v1255 = vpop.f32.mrb[0].mxu0
    %v1256 = vpop.f32.mrb[0].mxu0
    %v1257 = vpop.f32.mrb[0].mxu0
    %1258 = vdwg.mxu0
    %vm1259 = vcmask 1041408
    %v1260 = vsel %vm1259, %v1254, -inf
    %1261 = vmax.xlane.f32.xlu0 %v1260
    %v1262 = vpop.xlane.xlu0 %1261
    %v1263 = vsub.f32 %v1254, %v1262
    %v1264 = vmul.f32 %v1263, 1.442695
    %v1265 = vpow.pop %v1264
    %v1266 = vsel %vm1259, %v1265, 0.0
    %1267 = vadd.xlane.f32.xlu0 %v1266
    %v1268 = vpop.xlane.xlu0 %1267
    %v1269 = vrcp.pop %v1268
    %v1270 = vmul.f32 %v1265, %v1269
    %1271 = vst [vmem:[#allocation2] sm:$0x3] %v1270
    // Predicated region
    $region54: #{tpu_custom_call.1} parent=1 // pred_check
      _
    $region55: #{tpu_custom_call.1} parent=1 // pred_check_branch
      %1273 = sbr.rel (0) target = $region57
    $region56: #{tpu_custom_call.1} parent=1 // pred_region
      %s1275 = ssub.s32 32, 32
      %1276 = vsyncadd [#allocation3], %s1275
      %s1278 = sshll.u32 [#allocation2], 4
      %s1279 = int_to_ptr.vmem [resolvable:$true] %s1278
      %1281 = dma.vmem_to_hbm [thread:$0]  %s1279, 32, %s13, [#allocation3]
    $region57: #{tpu_custom_call.1} parent=1 // pred_fallthru
      _
    // Predicated region
    $region58: #{tpu_custom_call.1} parent=1 // pred_check
      _
    $region59: #{tpu_custom_call.1} parent=1 // pred_check_branch
      %1283 = sbr.rel (0) target = $region61
    $region60: #{tpu_custom_call.1} parent=1 // pred_region
      %1284 = dma.done [#allocation3], 32
    $region61: #{tpu_custom_call.1} parent=1 // pred_fallthru
      _
    %1285 = vsyncpa [#allocation3], 1

</llo_original>
